<compile_context>
chip_gen: v6e
topology: v6e:2x2x1
jax: 0.10.0
libtpu: 0.0.40
codegen_flags: <defaults>
</compile_context>

<pallas_src>
import functools

import jax
import jax.numpy as jnp
from jax.experimental import pallas as pl
from jax.experimental.pallas import tpu as pltpu


def _conv_bn_silu_kernel(x_ref, w_ref, b_ref, o_ref, *, k, stride, ho, wo):
    """One image: conv as k*k shifted matmuls + folded-BN bias + SiLU."""
    x = x_ref[0]                                     # (Hp, Wp, Cin)  bf16
    coutp = o_ref.shape[-1]
    acc = jnp.zeros((ho * wo, coutp), jnp.float32)
    for kh in range(k):                              # unrolled k*k taps
        for kw in range(k):
            xs = x[kh:kh + stride * ho:stride,
                   kw:kw + stride * wo:stride, :]    # (Ho, Wo, Cin)
            xs = xs.reshape(ho * wo, xs.shape[-1])   # (Ho*Wo, Cin)
            acc = acc + jnp.dot(xs, w_ref[kh, kw],   # bf16 x bf16 -> f32 acc
                                preferred_element_type=jnp.float32)
    y = acc + b_ref[...]                             # folded BN bias (f32)
    # SiLU in f32, then lane-dense (Ho*Wo, Coutp) store.
    o_ref[0] = (y * jax.nn.sigmoid(y)).astype(o_ref.dtype)


@functools.partial(jax.jit,
                   static_argnames=("kernel_size", "stride", "eps",
                                    "compute_dtype"))
def conv_bn_activation(x_nchw, conv_w, bn_gamma, bn_beta, bn_mean, bn_var,
                       *, kernel_size=3, stride=1, eps=1e-5,
                       compute_dtype=jnp.bfloat16):
    """Forward of ConvBNActivation. x_nchw: (N, Cin, H, W). Returns NCHW."""
    k = kernel_size
    pad = (k - 1) // 2
    n, cin, h, w = x_nchw.shape
    cout = conv_w.shape[0]
    ho = (h + 2 * pad - k) // stride + 1
    wo = (w + 2 * pad - k) // stride + 1
    hp, wp = h + 2 * pad, w + 2 * pad

    # --- glue: layout, spatial zero-pad, BN folding (all cheap, done once) ---
    x_nhwc = jnp.transpose(x_nchw, (0, 2, 3, 1))                  # NCHW -> NHWC
    x_pad = jnp.pad(x_nhwc, ((0, 0), (pad, pad), (pad, pad), (0, 0)))
    x_pad = x_pad.astype(compute_dtype)                           # bf16 stream

    inv = bn_gamma * jax.lax.rsqrt(bn_var + eps)                  # (Cout,)
    w_fold = conv_w * inv[:, None, None, None]                    # scale folded
    w_mat = jnp.transpose(w_fold, (2, 3, 1, 0))                   # (K,K,Cin,Cout)
    coutp = ((cout + 127) // 128) * 128                           # lane-dense N
    if coutp != cout:
        w_mat = jnp.pad(w_mat, ((0, 0), (0, 0), (0, 0), (0, coutp - cout)))
    w_mat = w_mat.astype(compute_dtype)
    bias = jnp.pad(bn_beta - bn_mean * inv, (0, coutp - cout))
    bias = bias.reshape(1, coutp).astype(jnp.float32)

    kern = functools.partial(_conv_bn_silu_kernel,
                             k=k, stride=stride, ho=ho, wo=wo)

    out_itemsize = jnp.dtype(x_nchw.dtype).itemsize
    flops = 2 * n * ho * wo * k * k * cin * coutp
    bytes_accessed = (n * hp * wp * cin * 2           # bf16 input
                      + k * k * cin * coutp * 2       # bf16 weights
                      + coutp * 4                     # f32 bias
                      + n * ho * wo * coutp * out_itemsize)

    # --- hot path: conv + BN bias + SiLU fused, one image per grid step -----
    out_flat = pl.pallas_call(
        kern,
        out_shape=jax.ShapeDtypeStruct((n, ho * wo, coutp), x_nchw.dtype),
        grid_spec=pltpu.PrefetchScalarGridSpec(
            num_scalar_prefetch=0,
            grid=(n,),
            in_specs=[
                pl.BlockSpec((1, hp, wp, cin), lambda i: (i, 0, 0, 0)),
                pl.BlockSpec((k, k, cin, coutp), lambda i: (0, 0, 0, 0)),
                pl.BlockSpec((1, coutp), lambda i: (0, 0)),
            ],
            out_specs=pl.BlockSpec((1, ho * wo, coutp), lambda i: (i, 0, 0)),
        ),
        compiler_params=pltpu.CompilerParams(
            dimension_semantics=("parallel",),
            vmem_limit_bytes=32 * 1024 * 1024),
        cost_estimate=pl.CostEstimate(
            flops=flops,
            transcendentals=n * ho * wo * coutp,
            bytes_accessed=bytes_accessed),
    )(x_pad, w_mat, bias)

    out = out_flat[:, :, :cout].reshape(n, ho, wo, cout)           # NHWC
    return jnp.transpose(out, (0, 3, 1, 2))                        # -> NCHW


def _reference(x_nchw, conv_w, gamma, beta, mean, var, *, stride, eps=1e-5,
               compute_dtype=jnp.float32):
    """Pure-JAX reference (conv + eval-mode BN + SiLU).

    compute_dtype lets us match the kernel's bf16 operand quantization
    (accumulation stays f32) for a tight numerical check.
    """
    k = conv_w.shape[-1]
    pad = (k - 1) // 2
    inv = gamma * jax.lax.rsqrt(var + eps)
    w_fold = conv_w * inv[:, None, None, None]
    b_fold = (beta - mean * inv).reshape(1, -1, 1, 1)
    y = jax.lax.conv_general_dilated(
        x_nchw.astype(compute_dtype), w_fold.astype(compute_dtype),
        window_strides=(stride, stride), padding=((pad, pad), (pad, pad)),
        dimension_numbers=("NCHW", "OIHW", "NCHW"),
        preferred_element_type=jnp.float32)
    y = y + b_fold
    return y * jax.nn.sigmoid(y)


if __name__ == "__main__":
    key = jax.random.PRNGKey(0)
    k_x, k_w, k_g, k_b, k_m, k_v = jax.random.split(key, 6)

    # Module config (small, consistent with ConvBNActivation defaults).
    in_channel, out_channel, kernel_size, stride = 4, 8, 3, 1
    N, H, W = 2, 16, 16

    x = jax.random.normal(k_x, (N, in_channel, H, W), dtype=jnp.float32)
    conv_w = jax.random.normal(
        k_w, (out_channel, in_channel, kernel_size, kernel_size),
        dtype=jnp.float32) * 0.1
    bn_gamma = 1.0 + 0.1 * jax.random.normal(k_g, (out_channel,), jnp.float32)
    bn_beta = 0.1 * jax.random.normal(k_b, (out_channel,), jnp.float32)
    bn_mean = 0.1 * jax.random.normal(k_m, (out_channel,), jnp.float32)
    bn_var = jnp.abs(jax.random.normal(k_v, (out_channel,), jnp.float32)) + 0.5

    out = conv_bn_activation(
        x, conv_w, bn_gamma, bn_beta, bn_mean, bn_var,
        kernel_size=kernel_size, stride=stride)
    out = jax.block_until_ready(out)
    assert out.shape == (N, out_channel, H, W), out.shape

    # Tight check against a reference with matching bf16 operand quantization
    # (f32 accumulation), then a sanity check against the pure-f32 reference.
    ref_matched = _reference(x, conv_w, bn_gamma, bn_beta, bn_mean, bn_var,
                             stride=stride, compute_dtype=jnp.bfloat16)
    ref_f32 = _reference(x, conv_w, bn_gamma, bn_beta, bn_mean, bn_var,
                         stride=stride, compute_dtype=jnp.float32)
    assert jnp.allclose(out, ref_matched, atol=2e-3, rtol=2e-3), (
        float(jnp.max(jnp.abs(out - ref_matched))))
    assert jnp.allclose(out, ref_f32, atol=2e-2, rtol=2e-2), (
        float(jnp.max(jnp.abs(out - ref_f32))))
    print("KERNEL_OK")
</pallas_src>

<mosaic_0001>
module attributes {stable_mosaic.version = 11 : i64} {
  func.func @_conv_bn_silu_kernel(%arg0: i32, %arg1: memref<1x18x18x4xbf16, #tpu.memory_space<vmem>>, %arg2: memref<3x3x4x128xbf16, #tpu.memory_space<vmem>>, %arg3: memref<1x128xf32, #tpu.memory_space<vmem>>, %arg4: memref<1x256x128xf32, #tpu.memory_space<vmem>>) attributes {dimension_semantics = [#tpu.dimension_semantics<parallel>], iteration_bounds = array<i64: 2>, scalar_prefetch = 0 : i64, scratch_operands = 0 : i64, tpu.core_type = #tpu.core_type<tc>, window_params = [{transform_indices = @transform_0, window_bounds = array<i64: 1, 18, 18, 4>}, {pipeline_mode = #tpu.pipeline_mode<synchronous>, transform_indices = @transform_1, window_bounds = array<i64: 3, 3, 4, 128>}, {pipeline_mode = #tpu.pipeline_mode<synchronous>, transform_indices = @transform_2, window_bounds = array<i64: 1, 128>}, {transform_indices = @transform_3, window_bounds = array<i64: 1, 256, 128>}]} {
    %c0 = arith.constant 0 : index
    %c0_0 = arith.constant 0 : index
    %c0_1 = arith.constant 0 : index
    %c0_2 = arith.constant 0 : index
    %0 = vector.load %arg1[%c0, %c0_0, %c0_1, %c0_2] : memref<1x18x18x4xbf16, #tpu.memory_space<vmem>>, vector<1x18x18x4xbf16>
    %1 = vector.shape_cast %0 : vector<1x18x18x4xbf16> to vector<18x18x4xbf16>
    %cst = arith.constant 0.000000e+00 : f32
    %2 = vector.broadcast %cst : f32 to vector<256x128xf32>
    %3 = vector.extract_strided_slice %1 {offsets = [0, 0, 0], sizes = [16, 16, 4], strides = [1, 1, 1]} : vector<18x18x4xbf16> to vector<16x16x4xbf16>
    %4 = vector.shape_cast %3 : vector<16x16x4xbf16> to vector<256x4xbf16>
    %c0_3 = arith.constant 0 : index
    %c0_4 = arith.constant 0 : index
    %c0_5 = arith.constant 0 : index
    %c0_6 = arith.constant 0 : index
    %5 = vector.load %arg2[%c0_3, %c0_4, %c0_5, %c0_6] : memref<3x3x4x128xbf16, #tpu.memory_space<vmem>>, vector<1x1x4x128xbf16>
    %6 = vector.shape_cast %5 : vector<1x1x4x128xbf16> to vector<4x128xbf16>
    %cst_7 = arith.constant dense<0.000000e+00> : vector<256x128xf32>
    %7 = tpu.matmul %4, %6, %cst_7 {dimension_numbers = #tpu.dot_dimension_numbers<[1], [0], [0], [1], [0, 0, 1, 1], [], []>} : vector<256x4xbf16>, vector<4x128xbf16>, vector<256x128xf32> -> vector<256x128xf32>
    %8 = arith.addf %2, %7 : vector<256x128xf32>
    %9 = vector.extract_strided_slice %1 {offsets = [0, 1, 0], sizes = [16, 16, 4], strides = [1, 1, 1]} : vector<18x18x4xbf16> to vector<16x16x4xbf16>
    %10 = vector.shape_cast %9 : vector<16x16x4xbf16> to vector<256x4xbf16>
    %c0_8 = arith.constant 0 : index
    %c1 = arith.constant 1 : index
    %c0_9 = arith.constant 0 : index
    %c0_10 = arith.constant 0 : index
    %11 = vector.load %arg2[%c0_8, %c1, %c0_9, %c0_10] : memref<3x3x4x128xbf16, #tpu.memory_space<vmem>>, vector<1x1x4x128xbf16>
    %12 = vector.shape_cast %11 : vector<1x1x4x128xbf16> to vector<4x128xbf16>
    %cst_11 = arith.constant dense<0.000000e+00> : vector<256x128xf32>
    %13 = tpu.matmul %10, %12, %cst_11 {dimension_numbers = #tpu.dot_dimension_numbers<[1], [0], [0], [1], [0, 0, 1, 1], [], []>} : vector<256x4xbf16>, vector<4x128xbf16>, vector<256x128xf32> -> vector<256x128xf32>
    %14 = arith.addf %8, %13 : vector<256x128xf32>
    %15 = vector.extract_strided_slice %1 {offsets = [0, 2, 0], sizes = [16, 16, 4], strides = [1, 1, 1]} : vector<18x18x4xbf16> to vector<16x16x4xbf16>
    %16 = vector.shape_cast %15 : vector<16x16x4xbf16> to vector<256x4xbf16>
    %c0_12 = arith.constant 0 : index
    %c2 = arith.constant 2 : index
    %c0_13 = arith.constant 0 : index
    %c0_14 = arith.constant 0 : index
    %17 = vector.load %arg2[%c0_12, %c2, %c0_13, %c0_14] : memref<3x3x4x128xbf16, #tpu.memory_space<vmem>>, vector<1x1x4x128xbf16>
    %18 = vector.shape_cast %17 : vector<1x1x4x128xbf16> to vector<4x128xbf16>
    %cst_15 = arith.constant dense<0.000000e+00> : vector<256x128xf32>
    %19 = tpu.matmul %16, %18, %cst_15 {dimension_numbers = #tpu.dot_dimension_numbers<[1], [0], [0], [1], [0, 0, 1, 1], [], []>} : vector<256x4xbf16>, vector<4x128xbf16>, vector<256x128xf32> -> vector<256x128xf32>
    %20 = arith.addf %14, %19 : vector<256x128xf32>
    %21 = vector.extract_strided_slice %1 {offsets = [1, 0, 0], sizes = [16, 16, 4], strides = [1, 1, 1]} : vector<18x18x4xbf16> to vector<16x16x4xbf16>
    %22 = vector.shape_cast %21 : vector<16x16x4xbf16> to vector<256x4xbf16>
    %c1_16 = arith.constant 1 : index
    %c0_17 = arith.constant 0 : index
    %c0_18 = arith.constant 0 : index
    %c0_19 = arith.constant 0 : index
    %23 = vector.load %arg2[%c1_16, %c0_17, %c0_18, %c0_19] : memref<3x3x4x128xbf16, #tpu.memory_space<vmem>>, vector<1x1x4x128xbf16>
    %24 = vector.shape_cast %23 : vector<1x1x4x128xbf16> to vector<4x128xbf16>
    %cst_20 = arith.constant dense<0.000000e+00> : vector<256x128xf32>
    %25 = tpu.matmul %22, %24, %cst_20 {dimension_numbers = #tpu.dot_dimension_numbers<[1], [0], [0], [1], [0, 0, 1, 1], [], []>} : vector<256x4xbf16>, vector<4x128xbf16>, vector<256x128xf32> -> vector<256x128xf32>
    %26 = arith.addf %20, %25 : vector<256x128xf32>
    %27 = vector.extract_strided_slice %1 {offsets = [1, 1, 0], sizes = [16, 16, 4], strides = [1, 1, 1]} : vector<18x18x4xbf16> to vector<16x16x4xbf16>
    %28 = vector.shape_cast %27 : vector<16x16x4xbf16> to vector<256x4xbf16>
    %c1_21 = arith.constant 1 : index
    %c1_22 = arith.constant 1 : index
    %c0_23 = arith.constant 0 : index
    %c0_24 = arith.constant 0 : index
    %29 = vector.load %arg2[%c1_21, %c1_22, %c0_23, %c0_24] : memref<3x3x4x128xbf16, #tpu.memory_space<vmem>>, vector<1x1x4x128xbf16>
    %30 = vector.shape_cast %29 : vector<1x1x4x128xbf16> to vector<4x128xbf16>
    %cst_25 = arith.constant dense<0.000000e+00> : vector<256x128xf32>
    %31 = tpu.matmul %28, %30, %cst_25 {dimension_numbers = #tpu.dot_dimension_numbers<[1], [0], [0], [1], [0, 0, 1, 1], [], []>} : vector<256x4xbf16>, vector<4x128xbf16>, vector<256x128xf32> -> vector<256x128xf32>
    %32 = arith.addf %26, %31 : vector<256x128xf32>
    %33 = vector.extract_strided_slice %1 {offsets = [1, 2, 0], sizes = [16, 16, 4], strides = [1, 1, 1]} : vector<18x18x4xbf16> to vector<16x16x4xbf16>
    %34 = vector.shape_cast %33 : vector<16x16x4xbf16> to vector<256x4xbf16>
    %c1_26 = arith.constant 1 : index
    %c2_27 = arith.constant 2 : index
    %c0_28 = arith.constant 0 : index
    %c0_29 = arith.constant 0 : index
    %35 = vector.load %arg2[%c1_26, %c2_27, %c0_28, %c0_29] : memref<3x3x4x128xbf16, #tpu.memory_space<vmem>>, vector<1x1x4x128xbf16>
    %36 = vector.shape_cast %35 : vector<1x1x4x128xbf16> to vector<4x128xbf16>
    %cst_30 = arith.constant dense<0.000000e+00> : vector<256x128xf32>
    %37 = tpu.matmul %34, %36, %cst_30 {dimension_numbers = #tpu.dot_dimension_numbers<[1], [0], [0], [1], [0, 0, 1, 1], [], []>} : vector<256x4xbf16>, vector<4x128xbf16>, vector<256x128xf32> -> vector<256x128xf32>
    %38 = arith.addf %32, %37 : vector<256x128xf32>
    %39 = vector.extract_strided_slice %1 {offsets = [2, 0, 0], sizes = [16, 16, 4], strides = [1, 1, 1]} : vector<18x18x4xbf16> to vector<16x16x4xbf16>
    %40 = vector.shape_cast %39 : vector<16x16x4xbf16> to vector<256x4xbf16>
    %c2_31 = arith.constant 2 : index
    %c0_32 = arith.constant 0 : index
    %c0_33 = arith.constant 0 : index
    %c0_34 = arith.constant 0 : index
    %41 = vector.load %arg2[%c2_31, %c0_32, %c0_33, %c0_34] : memref<3x3x4x128xbf16, #tpu.memory_space<vmem>>, vector<1x1x4x128xbf16>
    %42 = vector.shape_cast %41 : vector<1x1x4x128xbf16> to vector<4x128xbf16>
    %cst_35 = arith.constant dense<0.000000e+00> : vector<256x128xf32>
    %43 = tpu.matmul %40, %42, %cst_35 {dimension_numbers = #tpu.dot_dimension_numbers<[1], [0], [0], [1], [0, 0, 1, 1], [], []>} : vector<256x4xbf16>, vector<4x128xbf16>, vector<256x128xf32> -> vector<256x128xf32>
    %44 = arith.addf %38, %43 : vector<256x128xf32>
    %45 = vector.extract_strided_slice %1 {offsets = [2, 1, 0], sizes = [16, 16, 4], strides = [1, 1, 1]} : vector<18x18x4xbf16> to vector<16x16x4xbf16>
    %46 = vector.shape_cast %45 : vector<16x16x4xbf16> to vector<256x4xbf16>
    %c2_36 = arith.constant 2 : index
    %c1_37 = arith.constant 1 : index
    %c0_38 = arith.constant 0 : index
    %c0_39 = arith.constant 0 : index
    %47 = vector.load %arg2[%c2_36, %c1_37, %c0_38, %c0_39] : memref<3x3x4x128xbf16, #tpu.memory_space<vmem>>, vector<1x1x4x128xbf16>
    %48 = vector.shape_cast %47 : vector<1x1x4x128xbf16> to vector<4x128xbf16>
    %cst_40 = arith.constant dense<0.000000e+00> : vector<256x128xf32>
    %49 = tpu.matmul %46, %48, %cst_40 {dimension_numbers = #tpu.dot_dimension_numbers<[1], [0], [0], [1], [0, 0, 1, 1], [], []>} : vector<256x4xbf16>, vector<4x128xbf16>, vector<256x128xf32> -> vector<256x128xf32>
    %50 = arith.addf %44, %49 : vector<256x128xf32>
    %51 = vector.extract_strided_slice %1 {offsets = [2, 2, 0], sizes = [16, 16, 4], strides = [1, 1, 1]} : vector<18x18x4xbf16> to vector<16x16x4xbf16>
    %52 = vector.shape_cast %51 : vector<16x16x4xbf16> to vector<256x4xbf16>
    %c2_41 = arith.constant 2 : index
    %c2_42 = arith.constant 2 : index
    %c0_43 = arith.constant 0 : index
    %c0_44 = arith.constant 0 : index
    %53 = vector.load %arg2[%c2_41, %c2_42, %c0_43, %c0_44] : memref<3x3x4x128xbf16, #tpu.memory_space<vmem>>, vector<1x1x4x128xbf16>
    %54 = vector.shape_cast %53 : vector<1x1x4x128xbf16> to vector<4x128xbf16>
    %cst_45 = arith.constant dense<0.000000e+00> : vector<256x128xf32>
    %55 = tpu.matmul %52, %54, %cst_45 {dimension_numbers = #tpu.dot_dimension_numbers<[1], [0], [0], [1], [0, 0, 1, 1], [], []>} : vector<256x4xbf16>, vector<4x128xbf16>, vector<256x128xf32> -> vector<256x128xf32>
    %56 = arith.addf %50, %55 : vector<256x128xf32>
    %c0_46 = arith.constant 0 : index
    %c0_47 = arith.constant 0 : index
    %57 = vector.load %arg3[%c0_46, %c0_47] : memref<1x128xf32, #tpu.memory_space<vmem>>, vector<1x128xf32>
    %58 = vector.broadcast %57 : vector<1x128xf32> to vector<256x128xf32>
    %59 = arith.addf %56, %58 : vector<256x128xf32>
    %60 = arith.negf %59 : vector<256x128xf32>
    %61 = math.exp %60 : vector<256x128xf32>
    %cst_48 = arith.constant 1.000000e+00 : f32
    %62 = vector.broadcast %cst_48 : f32 to vector<256x128xf32>
    %63 = arith.addf %62, %61 : vector<256x128xf32>
    %64 = arith.divf %62, %63 : vector<256x128xf32>
    %65 = arith.mulf %59, %64 : vector<256x128xf32>
    %c0_49 = arith.constant 0 : index
    %c0_50 = arith.constant 0 : index
    %c0_51 = arith.constant 0 : index
    %66 = vector.load %arg4[%c0_49, %c0_50, %c0_51] : memref<1x256x128xf32, #tpu.memory_space<vmem>>, vector<1x256x128xf32>
    %67 = vector.shape_cast %66 : vector<1x256x128xf32> to vector<256x128xf32>
    %68 = vector.shape_cast %65 : vector<256x128xf32> to vector<1x256x128xf32>
    tpu.vector_store %arg4[%c0_49, %c0_50, %c0_51], %68 {strides = array<i32>} : memref<1x256x128xf32, #tpu.memory_space<vmem>>, vector<1x256x128xf32>,
    return
  }
  func.func @transform_0(%arg0: i32) -> (i32, i32, i32, i32) {
    %c0_i32 = arith.constant 0 : i32
    %c0_i32_0 = arith.constant 0 : i32
    %c0_i32_1 = arith.constant 0 : i32
    %c0_i32_2 = arith.constant 0 : i32
    return %arg0, %c0_i32, %c0_i32_0, %c0_i32_1 : i32, i32, i32, i32
  }
  func.func @transform_1(%arg0: i32) -> (i32, i32, i32, i32) {
    %c0_i32 = arith.constant 0 : i32
    %c0_i32_0 = arith.constant 0 : i32
    %c0_i32_1 = arith.constant 0 : i32
    %c0_i32_2 = arith.constant 0 : i32
    %c0_i32_3 = arith.constant 0 : i32
    return %c0_i32, %c0_i32_0, %c0_i32_1, %c0_i32_2 : i32, i32, i32, i32
  }
  func.func @transform_2(%arg0: i32) -> (i32, i32) {
    %c0_i32 = arith.constant 0 : i32
    %c0_i32_0 = arith.constant 0 : i32
    %c0_i32_1 = arith.constant 0 : i32
    return %c0_i32, %c0_i32_0 : i32, i32
  }
  func.func @transform_3(%arg0: i32) -> (i32, i32, i32) {
    %c0_i32 = arith.constant 0 : i32
    %c0_i32_0 = arith.constant 0 : i32
    %c0_i32_1 = arith.constant 0 : i32
    return %arg0, %c0_i32, %c0_i32_0 : i32, i32, i32
  }
}

</mosaic_0001>

<llo_original>
// kernel: conv_bn_activation.1
$region0: #{conv_bn_activation.1}
  #allocation0 [shape = 'u32[]', space=smem, size = 0x4, offset = 0x4, fixed_abs, tag = 'smem constant byte address 0x4 - core index']
  #allocation1 [shape = 'u32[144,128]{1,0:T(1,128)}', space=vmem, size = 0x12000, scoped, tag = 'internal scratch']
  %s0 = inlined_call_operand.vmem [shape: bf16[2,18,18,4], index: 0, kind: input, shape index: {}]
  %s1 = inlined_call_operand.vmem [shape: bf16[3,3,4,128], index: 1, kind: input, shape index: {}]
  %s2 = inlined_call_operand.vmem [shape: f32[1,128], index: 2, kind: input, shape index: {}]
  %s3 = inlined_call_operand.vmem [shape: f32[2,256,128], index: 3, kind: output, shape index: {}]
  %s4 = sld [smem:[#allocation0]]
  $region45: #{conv_bn_activation.1} parent=0
    _
  %s6 = ssub.s32 1, %s4
  %s7 = scalar_select 0, %s6, %s4
  loop: start=0, step=1, limit=4
  $region2: #{conv_bn_activation.1} parent=0 // loop_pre_header
    _
  $region3: #{conv_bn_activation.1} parent=0 // loop_header
    %s9 = sphi 0, %s13
    %p10 = scmp.ge.s32.totalorder %s9, 4
    %s19 = sphi 0, %s21
    %s22 = sphi 0, %s19
    %s23 = sphi 0, %s22
    %s39 = sphi 0, %s23
    %s43 = sphi 0, %s43
    %s45 = sphi 0, %s43
    %s46 = sphi 0, %s45
    %s60 = sphi 0, %s46
    %s64 = sphi 0, %s64
    %s66 = sphi 0, %s64
    %s67 = sphi 0, %s66
    %s81 = sphi 0, %s67
    %s87 = sphi 0, %s89
    %s90 = sphi 0, %s87
    %s91 = sphi 0, %s90
    %s107 = sphi 0, %s91
  $region4: #{conv_bn_activation.1} parent=0 // loop_header_branch
    %12 = sbr.rel (%p10) target = $region8
  $region5: #{conv_bn_activation.1} parent=0 // loop_body
    %s14 = ssub.s32 %s9, 1
    %s15 = ssub.s32 %s9, 2
    %s16 = sadd.s32 %s9, 1
    %s17 = ssub.s32 %s9, %s16
    %p18 = scmp.eq.s32.totalorder %s17, 0
    %s20 = sadd.s32 %s19, 1
    %s21 = scalar_select %p18, %s19, %s20
    %p24 = pneg %p18
    %p25 = scmp.eq.s32.totalorder %s9, 1
    %p26 = por %p24, %p25
    %p27 = scmp.ne.s32.totalorder %s19, %s22
    %p28 = scmp.eq.s32.totalorder %s9, 0
    %p29 = por %p27, %p28
    %p30 = scmp.ne.s32.totalorder %s19, %s22
    %p31 = scmp.eq.s32.totalorder %s14, 1
    %p32 = por %p30, %p31
    %p33 = scmp.ne.s32.totalorder %s22, %s23
    %p34 = scmp.eq.s32.totalorder %s14, 0
    %p35 = por %p33, %p34
    %p36 = scmp.ne.s32.totalorder %s22, %s23
    %p37 = scmp.eq.s32.totalorder %s15, 1
    %p38 = por %p36, %p37
    %p40 = scmp.ne.s32.totalorder %s23, %s39
    %p41 = scmp.eq.s32.totalorder %s15, 0
    %p42 = por %p40, %p41
    %s44 = sadd.s32 %s43, 1
    %p47 = scmp.eq.s32.totalorder %s9, 1
    %p48 = scmp.ne.s32.totalorder %s43, %s45
    %p49 = scmp.eq.s32.totalorder %s9, 0
    %p50 = por %p48, %p49
    %p51 = scmp.ne.s32.totalorder %s43, %s45
    %p52 = scmp.eq.s32.totalorder %s14, 1
    %p53 = por %p51, %p52
    %p54 = scmp.ne.s32.totalorder %s45, %s46
    %p55 = scmp.eq.s32.totalorder %s14, 0
    %p56 = por %p54, %p55
    %p57 = scmp.ne.s32.totalorder %s45, %s46
    %p58 = scmp.eq.s32.totalorder %s15, 1
    %p59 = por %p57, %p58
    %p61 = scmp.ne.s32.totalorder %s46, %s60
    %p62 = scmp.eq.s32.totalorder %s15, 0
    %p63 = por %p61, %p62
    %s65 = sadd.s32 %s64, 1
    %p68 = scmp.eq.s32.totalorder %s9, 1
    %p69 = scmp.ne.s32.totalorder %s64, %s66
    %p70 = scmp.eq.s32.totalorder %s9, 0
    %p71 = por %p69, %p70
    %p72 = scmp.ne.s32.totalorder %s64, %s66
    %p73 = scmp.eq.s32.totalorder %s14, 1
    %p74 = por %p72, %p73
    %p75 = scmp.ne.s32.totalorder %s66, %s67
    %p76 = scmp.eq.s32.totalorder %s14, 0
    %p77 = por %p75, %p76
    %p78 = scmp.ne.s32.totalorder %s66, %s67
    %p79 = scmp.eq.s32.totalorder %s15, 1
    %p80 = por %p78, %p79
    %p82 = scmp.ne.s32.totalorder %s67, %s81
    %p83 = scmp.eq.s32.totalorder %s15, 0
    %p84 = por %p82, %p83
    %s85 = ssub.s32 %s9, %s16
    %p86 = scmp.eq.s32.totalorder %s85, 0
    %s88 = sadd.s32 %s87, 1
    %s89 = scalar_select %p86, %s87, %s88
    %p92 = pneg %p86
    %p93 = scmp.eq.s32.totalorder %s9, 1
    %p94 = por %p92, %p93
    %p95 = scmp.ne.s32.totalorder %s87, %s90
    %p96 = scmp.eq.s32.totalorder %s9, 0
    %p97 = por %p95, %p96
    %p98 = scmp.ne.s32.totalorder %s87, %s90
    %p99 = scmp.eq.s32.totalorder %s14, 1
    %p100 = por %p98, %p99
    %p101 = scmp.ne.s32.totalorder %s90, %s91
    %p102 = scmp.eq.s32.totalorder %s14, 0
    %p103 = por %p101, %p102
    %p104 = scmp.ne.s32.totalorder %s90, %s91
    %p105 = scmp.eq.s32.totalorder %s15, 1
    %p106 = por %p104, %p105
    %p108 = scmp.ne.s32.totalorder %s91, %s107
    %p109 = scmp.eq.s32.totalorder %s15, 0
    %p110 = por %p108, %p109
    %p111 = scmp.le.s32.totalorder 1, %s9
    %p112 = scmp.lt.s32.totalorder %s9, 3
    %p113 = pnand %p111, %p112
    %p114 = pneg %p113
    // Predicated region
    $region9: #{conv_bn_activation.1} parent=5 // pred_check
      _
    $region10: #{conv_bn_activation.1} parent=5 // pred_check_branch
      %116 = sbr.rel (%p113) target = $region12
    $region11: #{conv_bn_activation.1} parent=5 // pred_region
      %s117 = ssub.s32 %s9, 1
      // Predicated region
      $region13: #{conv_bn_activation.1} parent=11 // pred_check
        %p118 = pneg %p56
      $region14: #{conv_bn_activation.1} parent=11 // pred_check_branch
        %120 = sbr.rel (%p118) target = $region16
      $region15: #{conv_bn_activation.1} parent=11 // pred_region
        _
      $region16: #{conv_bn_activation.1} parent=11 // pred_fallthru
        _
      // Predicated region
      $region17: #{conv_bn_activation.1} parent=11 // pred_check
        %p121 = pneg %p77
      $region18: #{conv_bn_activation.1} parent=11 // pred_check_branch
        %123 = sbr.rel (%p121) target = $region20
      $region19: #{conv_bn_activation.1} parent=11 // pred_region
        _
      $region20: #{conv_bn_activation.1} parent=11 // pred_fallthru
        _
    $region12: #{conv_bn_activation.1} parent=5 // pred_fallthru
      _
    %p124 = scmp.lt.s32.totalorder %s9, 2
    // Predicated region
    $region21: #{conv_bn_activation.1} parent=5 // pred_check
      %p125 = pneg %p124
    $region22: #{conv_bn_activation.1} parent=5 // pred_check_branch
      %127 = sbr.rel (%p125) target = $region24
    $region23: #{conv_bn_activation.1} parent=5 // pred_region
      // Predicated region
      $region25: #{conv_bn_activation.1} parent=23 // pred_check
        %p128 = pneg %p29
      $region26: #{conv_bn_activation.1} parent=23 // pred_check_branch
        %130 = sbr.rel (%p128) target = $region28
      $region27: #{conv_bn_activation.1} parent=23 // pred_region
        %p131 = scmp.lt.s32.totalorder %s9, 1
        %s132 = scalar_select %p131, %s9, 1
        %s133 = smul.addr %s132, 54
        %s134 = smul.addr %s133, 4
        %s135 = scalar_lea.vmem %s0, %s134
      $region28: #{conv_bn_activation.1} parent=23 // pred_fallthru
        _
    $region24: #{conv_bn_activation.1} parent=5 // pred_fallthru
      _
    %p136 = scmp.le.s32.totalorder 1, %s9
    %p137 = scmp.lt.s32.totalorder %s9, 3
    %p138 = pnand %p136, %p137
    %p139 = pneg %p138
    // Predicated region
    $region29: #{conv_bn_activation.1} parent=5 // pred_check
      _
    $region30: #{conv_bn_activation.1} parent=5 // pred_check_branch
      %141 = sbr.rel (%p138) target = $region32
    $region31: #{conv_bn_activation.1} parent=5 // pred_region
      %s142 = ssub.s32 %s9, 1
      %p143 = scmp.lt.s32.totalorder %s14, 1
      %s144 = scalar_select %p143, %s14, 1
      %s145 = smul.addr %s144, 54
      %s146 = smul.addr %s145, 4
      %s147 = scalar_lea.vmem %s0, %s146
      %p148 = pneg %p35
      %p149 = pneg %p32
      %p150 = pneg %p56
      %p151 = pneg %p53
      %p152 = pneg %p77
      %p153 = pneg %p74
      %p154 = pneg %p103
      %p155 = pneg %p100
      %p156 = scmp.lt.s32.totalorder %s14, 1
      %s157 = scalar_select %p156, %s14, 1
      %s158 = smul.addr %s157, 32
      %s159 = smul.addr %s158, 8
      %s160 = scalar_lea.vmem %s3, %s159
      %p161 = scmp.lt.s32.totalorder %s14, 1
      %s162 = scalar_select %p161, %s14, 1
      %s163 = smul.addr %s162, 54
      %s164 = smul.addr %s163, 4
      %s165 = scalar_lea.vmem %s0, %s164
      %p166 = scmp.lt.s32.totalorder %s14, 1
      %s167 = scalar_select %p166, %s14, 1
      %s168 = smul.addr %s167, 32
      %s169 = smul.addr %s168, 8
      %s170 = scalar_lea.vmem %s3, %s169
      %v172 = vld [vmem:[%s165] sm:$0xf]
      %v173 = vld [vmem:[%s165 + $0x4] sm:$0xf]
      %v174 = vld [vmem:[%s165 + $0x8] sm:$0x1]
      %v175 = vld [vmem:[%s165 + $0xc] sm:$0xf]
      %v176 = vld [vmem:[%s165 + $0x10] sm:$0xf]
      %v177 = vld [vmem:[%s165 + $0x14] sm:$0x1]
      %v178 = vld [vmem:[%s165 + $0x18] sm:$0xf]
      %v179 = vld [vmem:[%s165 + $0x1c] sm:$0xf]
      %v180 = vld [vmem:[%s165 + $0x20] sm:$0x1]
      %v181 = vld [vmem:[%s165 + $0x24] sm:$0xf]
      %v182 = vld [vmem:[%s165 + $0x28] sm:$0xf]
      %v183 = vld [vmem:[%s165 + $0x2c] sm:$0x1]
      %v184 = vld [vmem:[%s165 + $0x30] sm:$0xf]
      %v185 = vld [vmem:[%s165 + $0x34] sm:$0xf]
      %v186 = vld [vmem:[%s165 + $0x38] sm:$0x1]
      %v187 = vld [vmem:[%s165 + $0x3c] sm:$0xf]
      %v188 = vld [vmem:[%s165 + $0x40] sm:$0xf]
      %v189 = vld [vmem:[%s165 + $0x44] sm:$0x1]
      %v190 = vld [vmem:[%s165 + $0x48] sm:$0xf]
      %v191 = vld [vmem:[%s165 + $0x4c] sm:$0xf]
      %v192 = vld [vmem:[%s165 + $0x50] sm:$0x1]
      %v193 = vld [vmem:[%s165 + $0x54] sm:$0xf]
      %v194 = vld [vmem:[%s165 + $0x58] sm:$0xf]
      %v195 = vld [vmem:[%s165 + $0x5c] sm:$0x1]
      %v196 = vld [vmem:[%s165 + $0x60] sm:$0xf]
      %v197 = vld [vmem:[%s165 + $0x64] sm:$0xf]
      %v198 = vld [vmem:[%s165 + $0x68] sm:$0x1]
      %v199 = vld [vmem:[%s165 + $0x6c] sm:$0xf]
      %v200 = vld [vmem:[%s165 + $0x70] sm:$0xf]
      %v201 = vld [vmem:[%s165 + $0x74] sm:$0x1]
      %v202 = vld [vmem:[%s165 + $0x78] sm:$0xf]
      %v203 = vld [vmem:[%s165 + $0x7c] sm:$0xf]
      %v204 = vld [vmem:[%s165 + $0x80] sm:$0x1]
      %v205 = vld [vmem:[%s165 + $0x84] sm:$0xf]
      %v206 = vld [vmem:[%s165 + $0x88] sm:$0xf]
      %v207 = vld [vmem:[%s165 + $0x8c] sm:$0x1]
      %v208 = vld [vmem:[%s165 + $0x90] sm:$0xf]
      %v209 = vld [vmem:[%s165 + $0x94] sm:$0xf]
      %v210 = vld [vmem:[%s165 + $0x98] sm:$0x1]
      %v211 = vld [vmem:[%s165 + $0x9c] sm:$0xf]
      %v212 = vld [vmem:[%s165 + $0xa0] sm:$0xf]
      %v213 = vld [vmem:[%s165 + $0xa4] sm:$0x1]
      %v214 = vld [vmem:[%s165 + $0xa8] sm:$0xf]
      %v215 = vld [vmem:[%s165 + $0xac] sm:$0xf]
      %v216 = vld [vmem:[%s165 + $0xb0] sm:$0x1]
      %v217 = vld [vmem:[%s165 + $0xb4] sm:$0xf]
      %v218 = vld [vmem:[%s165 + $0xb8] sm:$0xf]
      %v219 = vld [vmem:[%s165 + $0xbc] sm:$0x1]
      %v220 = vld [vmem:[%s165 + $0xc0] sm:$0xf]
      %v221 = vld [vmem:[%s165 + $0xc4] sm:$0xf]
      %v222 = vld [vmem:[%s165 + $0xc8] sm:$0x1]
      %v223 = vld [vmem:[%s165 + $0xcc] sm:$0xf]
      %v224 = vld [vmem:[%s165 + $0xd0] sm:$0xf]
      %v225 = vld [vmem:[%s165 + $0xd4] sm:$0x1]
      %v226 = vld [vmem:[%s1] sm:$0x3]
      %vm227 = vsmask.f32 3328
      %vm228 = vsmask.f32 7440
      %vm229 = vmor %vm227, %vm228
      %v231 = vshrl.u32 %v172, 16
      %v233 = vrot.slane %v231, 4
      %v234 = vshll.u32 %v172, 16
      %v236 = vrot.slane %v234, 5
      %v237 = vor.u32 %v233, %v236
      %v238 = vrot.slane %v237, 4
      %v240 = vshll.u32 %v173, 16
      %v242 = vrot.slane %v240, 5
      %v243 = vsel %vm229, %v238, %v242
      %v244 = vshrl.u32 %v173, 16
      %v246 = vrot.slane %v244, 4
      %v247 = vor.u32 %v246, %v242
      %v248 = vrot.slane %v247, 4
      %v250 = vshll.u32 %v174, 16
      %v252 = vrot.slane %v250, 5
      %v253 = vsel %vm229, %v248, %v252
      %v255 = vshrl.u32 %v175, 16
      %v257 = vrot.slane %v255, 4
      %v258 = vshll.u32 %v175, 16
      %v260 = vrot.slane %v258, 5
      %v261 = vor.u32 %v257, %v260
      %v262 = vrot.slane %v261, 4
      %v264 = vshll.u32 %v176, 16
      %v266 = vrot.slane %v264, 5
      %v267 = vsel %vm229, %v262, %v266
      %v268 = vshrl.u32 %v176, 16
      %v270 = vrot.slane %v268, 4
      %v271 = vor.u32 %v270, %v266
      %v272 = vrot.slane %v271, 4
      %v274 = vshll.u32 %v177, 16
      %v276 = vrot.slane %v274, 5
      %v277 = vsel %vm229, %v272, %v276
      %v279 = vshrl.u32 %v178, 16
      %v281 = vrot.slane %v279, 4
      %v282 = vshll.u32 %v178, 16
      %v284 = vrot.slane %v282, 5
      %v285 = vor.u32 %v281, %v284
      %v286 = vrot.slane %v285, 4
      %v288 = vshll.u32 %v179, 16
      %v290 = vrot.slane %v288, 5
      %v291 = vsel %vm229, %v286, %v290
      %v292 = vshrl.u32 %v179, 16
      %v294 = vrot.slane %v292, 4
      %v295 = vor.u32 %v294, %v290
      %v296 = vrot.slane %v295, 4
      %v298 = vshll.u32 %v180, 16
      %v300 = vrot.slane %v298, 5
      %v301 = vsel %vm229, %v296, %v300
      %v303 = vshrl.u32 %v181, 16
      %v305 = vrot.slane %v303, 4
      %v306 = vshll.u32 %v181, 16
      %v308 = vrot.slane %v306, 5
      %v309 = vor.u32 %v305, %v308
      %v310 = vrot.slane %v309, 4
      %v312 = vshll.u32 %v182, 16
      %v314 = vrot.slane %v312, 5
      %v315 = vsel %vm229, %v310, %v314
      %v316 = vshrl.u32 %v182, 16
      %v318 = vrot.slane %v316, 4
      %v319 = vor.u32 %v318, %v314
      %v320 = vrot.slane %v319, 4
      %v322 = vshll.u32 %v183, 16
      %v324 = vrot.slane %v322, 5
      %v325 = vsel %vm229, %v320, %v324
      %v327 = vshrl.u32 %v184, 16
      %v329 = vrot.slane %v327, 4
      %v330 = vshll.u32 %v184, 16
      %v332 = vrot.slane %v330, 5
      %v333 = vor.u32 %v329, %v332
      %v334 = vrot.slane %v333, 4
      %v336 = vshll.u32 %v185, 16
      %v338 = vrot.slane %v336, 5
      %v339 = vsel %vm229, %v334, %v338
      %v340 = vshrl.u32 %v185, 16
      %v342 = vrot.slane %v340, 4
      %v343 = vor.u32 %v342, %v338
      %v344 = vrot.slane %v343, 4
      %v346 = vshll.u32 %v186, 16
      %v348 = vrot.slane %v346, 5
      %v349 = vsel %vm229, %v344, %v348
      %v351 = vshrl.u32 %v187, 16
      %v353 = vrot.slane %v351, 4
      %v354 = vshll.u32 %v187, 16
      %v356 = vrot.slane %v354, 5
      %v357 = vor.u32 %v353, %v356
      %v358 = vrot.slane %v357, 4
      %v360 = vshll.u32 %v188, 16
      %v362 = vrot.slane %v360, 5
      %v363 = vsel %vm229, %v358, %v362
      %v364 = vshrl.u32 %v188, 16
      %v366 = vrot.slane %v364, 4
      %v367 = vor.u32 %v366, %v362
      %v368 = vrot.slane %v367, 4
      %v370 = vshll.u32 %v189, 16
      %v372 = vrot.slane %v370, 5
      %v373 = vsel %vm229, %v368, %v372
      %v375 = vshrl.u32 %v190, 16
      %v377 = vrot.slane %v375, 4
      %v378 = vshll.u32 %v190, 16
      %v380 = vrot.slane %v378, 5
      %v381 = vor.u32 %v377, %v380
      %v382 = vrot.slane %v381, 4
      %v384 = vshll.u32 %v191, 16
      %v386 = vrot.slane %v384, 5
      %v387 = vsel %vm229, %v382, %v386
      %v388 = vshrl.u32 %v191, 16
      %v390 = vrot.slane %v388, 4
      %v391 = vor.u32 %v390, %v386
      %v392 = vrot.slane %v391, 4
      %v394 = vshll.u32 %v192, 16
      %v396 = vrot.slane %v394, 5
      %v397 = vsel %vm229, %v392, %v396
      %v399 = vshrl.u32 %v193, 16
      %v401 = vrot.slane %v399, 4
      %v402 = vshll.u32 %v193, 16
      %v404 = vrot.slane %v402, 5
      %v405 = vor.u32 %v401, %v404
      %v406 = vrot.slane %v405, 4
      %v408 = vshll.u32 %v194, 16
      %v410 = vrot.slane %v408, 5
      %v411 = vsel %vm229, %v406, %v410
      %v412 = vshrl.u32 %v194, 16
      %v414 = vrot.slane %v412, 4
      %v415 = vor.u32 %v414, %v410
      %v416 = vrot.slane %v415, 4
      %v418 = vshll.u32 %v195, 16
      %v420 = vrot.slane %v418, 5
      %v421 = vsel %vm229, %v416, %v420
      %v423 = vshrl.u32 %v196, 16
      %v425 = vrot.slane %v423, 4
      %v426 = vshll.u32 %v196, 16
      %v428 = vrot.slane %v426, 5
      %v429 = vor.u32 %v425, %v428
      %v430 = vrot.slane %v429, 4
      %v432 = vshll.u32 %v197, 16
      %v434 = vrot.slane %v432, 5
      %v435 = vsel %vm229, %v430, %v434
      %v436 = vshrl.u32 %v197, 16
      %v438 = vrot.slane %v436, 4
      %v439 = vor.u32 %v438, %v434
      %v440 = vrot.slane %v439, 4
      %v442 = vshll.u32 %v198, 16
      %v444 = vrot.slane %v442, 5
      %v445 = vsel %vm229, %v440, %v444
      %v447 = vshrl.u32 %v199, 16
      %v449 = vrot.slane %v447, 4
      %v450 = vshll.u32 %v199, 16
      %v452 = vrot.slane %v450, 5
      %v453 = vor.u32 %v449, %v452
      %v454 = vrot.slane %v453, 4
      %v456 = vshll.u32 %v200, 16
      %v458 = vrot.slane %v456, 5
      %v459 = vsel %vm229, %v454, %v458
      %v460 = vshrl.u32 %v200, 16
      %v462 = vrot.slane %v460, 4
      %v463 = vor.u32 %v462, %v458
      %v464 = vrot.slane %v463, 4
      %v466 = vshll.u32 %v201, 16
      %v468 = vrot.slane %v466, 5
      %v469 = vsel %vm229, %v464, %v468
      %v471 = vshrl.u32 %v202, 16
      %v473 = vrot.slane %v471, 4
      %v474 = vshll.u32 %v202, 16
      %v476 = vrot.slane %v474, 5
      %v477 = vor.u32 %v473, %v476
      %v478 = vrot.slane %v477, 4
      %v480 = vshll.u32 %v203, 16
      %v482 = vrot.slane %v480, 5
      %v483 = vsel %vm229, %v478, %v482
      %v484 = vshrl.u32 %v203, 16
      %v486 = vrot.slane %v484, 4
      %v487 = vor.u32 %v486, %v482
      %v488 = vrot.slane %v487, 4
      %v490 = vshll.u32 %v204, 16
      %v492 = vrot.slane %v490, 5
      %v493 = vsel %vm229, %v488, %v492
      %v495 = vshrl.u32 %v205, 16
      %v497 = vrot.slane %v495, 4
      %v498 = vshll.u32 %v205, 16
      %v500 = vrot.slane %v498, 5
      %v501 = vor.u32 %v497, %v500
      %v502 = vrot.slane %v501, 4
      %v504 = vshll.u32 %v206, 16
      %v506 = vrot.slane %v504, 5
      %v507 = vsel %vm229, %v502, %v506
      %v508 = vshrl.u32 %v206, 16
      %v510 = vrot.slane %v508, 4
      %v511 = vor.u32 %v510, %v506
      %v512 = vrot.slane %v511, 4
      %v514 = vshll.u32 %v207, 16
      %v516 = vrot.slane %v514, 5
      %v517 = vsel %vm229, %v512, %v516
      %v519 = vshrl.u32 %v208, 16
      %v521 = vrot.slane %v519, 4
      %v522 = vshll.u32 %v208, 16
      %v524 = vrot.slane %v522, 5
      %v525 = vor.u32 %v521, %v524
      %v526 = vrot.slane %v525, 4
      %v528 = vshll.u32 %v209, 16
      %v530 = vrot.slane %v528, 5
      %v531 = vsel %vm229, %v526, %v530
      %v532 = vshrl.u32 %v209, 16
      %v534 = vrot.slane %v532, 4
      %v535 = vor.u32 %v534, %v530
      %v536 = vrot.slane %v535, 4
      %v538 = vshll.u32 %v210, 16
      %v540 = vrot.slane %v538, 5
      %v541 = vsel %vm229, %v536, %v540
      %v543 = vshrl.u32 %v211, 16
      %v545 = vrot.slane %v543, 4
      %v546 = vshll.u32 %v211, 16
      %v548 = vrot.slane %v546, 5
      %v549 = vor.u32 %v545, %v548
      %v550 = vrot.slane %v549, 4
      %v552 = vshll.u32 %v212, 16
      %v554 = vrot.slane %v552, 5
      %v555 = vsel %vm229, %v550, %v554
      %v556 = vshrl.u32 %v212, 16
      %v558 = vrot.slane %v556, 4
      %v559 = vor.u32 %v558, %v554
      %v560 = vrot.slane %v559, 4
      %v562 = vshll.u32 %v213, 16
      %v564 = vrot.slane %v562, 5
      %v565 = vsel %vm229, %v560, %v564
      %v567 = vshrl.u32 %v214, 16
      %v569 = vrot.slane %v567, 4
      %v570 = vshll.u32 %v214, 16
      %v572 = vrot.slane %v570, 5
      %v573 = vor.u32 %v569, %v572
      %v574 = vrot.slane %v573, 4
      %v576 = vshll.u32 %v215, 16
      %v578 = vrot.slane %v576, 5
      %v579 = vsel %vm229, %v574, %v578
      %v580 = vshrl.u32 %v215, 16
      %v582 = vrot.slane %v580, 4
      %v583 = vor.u32 %v582, %v578
      %v584 = vrot.slane %v583, 4
      %v586 = vshll.u32 %v216, 16
      %v588 = vrot.slane %v586, 5
      %v589 = vsel %vm229, %v584, %v588
      %v591 = vshrl.u32 %v217, 16
      %v593 = vrot.slane %v591, 4
      %v594 = vshll.u32 %v217, 16
      %v596 = vrot.slane %v594, 5
      %v597 = vor.u32 %v593, %v596
      %v598 = vrot.slane %v597, 4
      %v600 = vshll.u32 %v218, 16
      %v602 = vrot.slane %v600, 5
      %v603 = vsel %vm229, %v598, %v602
      %v604 = vshrl.u32 %v218, 16
      %v606 = vrot.slane %v604, 4
      %v607 = vor.u32 %v606, %v602
      %v608 = vrot.slane %v607, 4
      %v610 = vshll.u32 %v219, 16
      %v612 = vrot.slane %v610, 5
      %v613 = vsel %vm229, %v608, %v612
      %s614 = scalar_lea.vmem %s1, 2
      %v615 = vld [vmem:[%s614] sm:$0x3]
      %v616 = vunpack.c.l.b16 %v243
      %v617 = vunpack.c.l.b16 %v253
      %v618 = vunpack.c.l.b16 %v267
      %v619 = vunpack.c.l.b16 %v277
      %v620 = vunpack.c.l.b16 %v291
      %v621 = vunpack.c.l.b16 %v301
      %v622 = vunpack.c.l.b16 %v315
      %v623 = vunpack.c.l.b16 %v325
      %v624 = vunpack.c.l.b16 %v339
      %v625 = vunpack.c.l.b16 %v349
      %v626 = vunpack.c.l.b16 %v363
      %v627 = vunpack.c.l.b16 %v373
      %v628 = vunpack.c.l.b16 %v387
      %v629 = vunpack.c.l.b16 %v397
      %v630 = vunpack.c.l.b16 %v411
      %v631 = vunpack.c.l.b16 %v421
      %v632 = vunpack.c.l.b16 %v435
      %v633 = vunpack.c.l.b16 %v445
      %v634 = vunpack.c.l.b16 %v459
      %v635 = vunpack.c.l.b16 %v469
      %v636 = vunpack.c.l.b16 %v483
      %v637 = vunpack.c.l.b16 %v493
      %v638 = vunpack.c.l.b16 %v507
      %v639 = vunpack.c.l.b16 %v517
      %v640 = vunpack.c.l.b16 %v531
      %v641 = vunpack.c.l.b16 %v541
      %v642 = vunpack.c.l.b16 %v555
      %v643 = vunpack.c.l.b16 %v565
      %v644 = vunpack.c.l.b16 %v579
      %v645 = vunpack.c.l.b16 %v589
      %v646 = vunpack.c.l.b16 %v603
      %v647 = vunpack.c.l.b16 %v613
      %v648 = vpack.c.b16 %v617, %v616
      %v649 = vpack.c.b16 %v619, %v618
      %v650 = vpack.c.b16 %v621, %v620
      %v651 = vpack.c.b16 %v623, %v622
      %v652 = vpack.c.b16 %v625, %v624
      %v653 = vpack.c.b16 %v627, %v626
      %v654 = vpack.c.b16 %v629, %v628
      %v655 = vpack.c.b16 %v631, %v630
      %v656 = vpack.c.b16 %v633, %v632
      %v657 = vpack.c.b16 %v635, %v634
      %v658 = vpack.c.b16 %v637, %v636
      %v659 = vpack.c.b16 %v639, %v638
      %v660 = vpack.c.b16 %v641, %v640
      %v661 = vpack.c.b16 %v643, %v642
      %v662 = vpack.c.b16 %v645, %v644
      %v663 = vpack.c.b16 %v647, %v646
      %vm664 = vcmask 31744
      %v666 = vsel %vm664, %v648, 0
      %v669 = vsel %vm664, %v649, 0
      %v672 = vsel %vm664, %v650, 0
      %v675 = vsel %vm664, %v651, 0
      %v678 = vsel %vm664, %v652, 0
      %v681 = vsel %vm664, %v653, 0
      %v684 = vsel %vm664, %v654, 0
      %v687 = vsel %vm664, %v655, 0
      %v690 = vsel %vm664, %v656, 0
      %v693 = vsel %vm664, %v657, 0
      %v696 = vsel %vm664, %v658, 0
      %v699 = vsel %vm664, %v659, 0
      %v702 = vsel %vm664, %v660, 0
      %v705 = vsel %vm664, %v661, 0
      %v708 = vsel %vm664, %v662, 0
      %v711 = vsel %vm664, %v663, 0
      %vm713 = vcmask 1041408
      %v715 = vsel %vm713, %v615, 0
      %717 = vmatprep.subr.bf16.mxu0 0
      %718 = vmatpush1.bf16.msra.mxu0 0
      %719 = vmatprep.subr.bf16.mxu0 0
      %720 = vmatpush1.bf16.msra.mxu0 0
      %721 = vmatprep.subr.bf16.mxu0 0
      %722 = vmatpush1.bf16.msra.mxu0 0
      %723 = vmatprep.subr.bf16.mxu0 0
      %724 = vmatpush1.bf16.msra.mxu0 0
      %725 = vmatprep.subr.bf16.mxu0 0
      %726 = vmatpush1.bf16.msra.mxu0 0
      %727 = vmatprep.subr.bf16.mxu0 0
      %728 = vmatpush1.bf16.msra.mxu0 0
      %729 = vmatprep.subr.bf16.mxu0 0
      %730 = vmatpush1.bf16.msra.mxu0 0
      %731 = vmatprep.subr.bf16.mxu0 0
      %732 = vmatpush1.bf16.msra.mxu0 %v715
      %733 = vmatprep.subr.bf16.mxu0 0
      %734 = vmatpush2.bf16.msra.mxu0 0
      %735 = vmatprep.subr.bf16.mxu0 0
      %736 = vmatpush2.bf16.msra.mxu0 0
      %737 = vmatprep.subr.bf16.mxu0 0
      %738 = vmatpush2.bf16.msra.mxu0 0
      %739 = vmatprep.subr.bf16.mxu0 0
      %740 = vmatpush2.bf16.msra.mxu0 0
      %741 = vmatprep.subr.bf16.mxu0 0
      %742 = vmatpush2.bf16.msra.mxu0 0
      %743 = vmatprep.subr.bf16.mxu0 0
      %744 = vmatpush2.bf16.msra.mxu0 0
      %745 = vmatprep.subr.bf16.mxu0 0
      %746 = vmatpush2.bf16.msra.mxu0 0
      %747 = vmatprep.subr.bf16.mxu0 0
      %748 = vmatpush2.bf16.msra.mxu0 0
      %749 = vmatprep.mubr.bf16.mxu0 0
      %750 = vmatmul.mubr.bf16.gmra.mxu0 %v666
      %v751 = vpop.f32.mrf.mxu0
      %v752 = vadd.f32 0.0, %v751
      %v753 = vpop.f32.mrf.mxu0
      %v754 = vpop.f32.mrf.mxu0
      %v755 = vadd.f32 0.0, %v754
      %v756 = vpop.f32.mrf.mxu0
      %757 = vmatprep.mubr.bf16.mxu0 0
      %758 = vmatmul.mubr.bf16.gmra.mxu0 %v669
      %v759 = vpop.f32.mrf.mxu0
      %v760 = vadd.f32 0.0, %v759
      %v761 = vpop.f32.mrf.mxu0
      %v762 = vpop.f32.mrf.mxu0
      %v763 = vadd.f32 0.0, %v762
      %v764 = vpop.f32.mrf.mxu0
      %765 = vmatprep.mubr.bf16.mxu0 0
      %766 = vmatmul.mubr.bf16.gmra.mxu0 %v672
      %v767 = vpop.f32.mrf.mxu0
      %v768 = vadd.f32 0.0, %v767
      %v769 = vpop.f32.mrf.mxu0
      %v770 = vpop.f32.mrf.mxu0
      %v771 = vadd.f32 0.0, %v770
      %v772 = vpop.f32.mrf.mxu0
      %773 = vmatprep.mubr.bf16.mxu0 0
      %774 = vmatmul.mubr.bf16.gmra.mxu0 %v675
      %v775 = vpop.f32.mrf.mxu0
      %v776 = vadd.f32 0.0, %v775
      %v777 = vpop.f32.mrf.mxu0
      %v778 = vpop.f32.mrf.mxu0
      %v779 = vadd.f32 0.0, %v778
      %v780 = vpop.f32.mrf.mxu0
      %781 = vmatprep.mubr.bf16.mxu0 0
      %782 = vmatmul.mubr.bf16.gmra.mxu0 %v678
      %v783 = vpop.f32.mrf.mxu0
      %v784 = vadd.f32 0.0, %v783
      %v785 = vpop.f32.mrf.mxu0
      %v786 = vpop.f32.mrf.mxu0
      %v787 = vadd.f32 0.0, %v786
      %v788 = vpop.f32.mrf.mxu0
      %789 = vmatprep.mubr.bf16.mxu0 0
      %790 = vmatmul.mubr.bf16.gmra.mxu0 %v681
      %v791 = vpop.f32.mrf.mxu0
      %v792 = vadd.f32 0.0, %v791
      %v793 = vpop.f32.mrf.mxu0
      %v794 = vpop.f32.mrf.mxu0
      %v795 = vadd.f32 0.0, %v794
      %v796 = vpop.f32.mrf.mxu0
      %797 = vmatprep.mubr.bf16.mxu0 0
      %798 = vmatmul.mubr.bf16.gmra.mxu0 %v684
      %v799 = vpop.f32.mrf.mxu0
      %v800 = vadd.f32 0.0, %v799
      %v801 = vpop.f32.mrf.mxu0
      %v802 = vpop.f32.mrf.mxu0
      %v803 = vadd.f32 0.0, %v802
      %v804 = vpop.f32.mrf.mxu0
      %805 = vmatprep.mubr.bf16.mxu0 0
      %806 = vmatmul.mubr.bf16.gmra.mxu0 %v687
      %v807 = vpop.f32.mrf.mxu0
      %v808 = vadd.f32 0.0, %v807
      %v809 = vpop.f32.mrf.mxu0
      %v810 = vpop.f32.mrf.mxu0
      %v811 = vadd.f32 0.0, %v810
      %v812 = vpop.f32.mrf.mxu0
      %813 = vmatprep.mubr.bf16.mxu0 0
      %814 = vmatmul.mubr.bf16.gmra.mxu0 %v690
      %v815 = vpop.f32.mrf.mxu0
      %v816 = vadd.f32 0.0, %v815
      %v817 = vpop.f32.mrf.mxu0
      %v818 = vpop.f32.mrf.mxu0
      %v819 = vadd.f32 0.0, %v818
      %v820 = vpop.f32.mrf.mxu0
      %821 = vmatprep.mubr.bf16.mxu0 0
      %822 = vmatmul.mubr.bf16.gmra.mxu0 %v693
      %v823 = vpop.f32.mrf.mxu0
      %v824 = vadd.f32 0.0, %v823
      %v825 = vpop.f32.mrf.mxu0
      %v826 = vpop.f32.mrf.mxu0
      %v827 = vadd.f32 0.0, %v826
      %v828 = vpop.f32.mrf.mxu0
      %829 = vmatprep.mubr.bf16.mxu0 0
      %830 = vmatmul.mubr.bf16.gmra.mxu0 %v696
      %v831 = vpop.f32.mrf.mxu0
      %v832 = vadd.f32 0.0, %v831
      %v833 = vpop.f32.mrf.mxu0
      %v834 = vpop.f32.mrf.mxu0
      %v835 = vadd.f32 0.0, %v834
      %v836 = vpop.f32.mrf.mxu0
      %837 = vmatprep.mubr.bf16.mxu0 0
      %838 = vmatmul.mubr.bf16.gmra.mxu0 %v699
      %v839 = vpop.f32.mrf.mxu0
      %v840 = vadd.f32 0.0, %v839
      %v841 = vpop.f32.mrf.mxu0
      %v842 = vpop.f32.mrf.mxu0
      %v843 = vadd.f32 0.0, %v842
      %v844 = vpop.f32.mrf.mxu0
      %845 = vmatprep.mubr.bf16.mxu0 0
      %846 = vmatmul.mubr.bf16.gmra.mxu0 %v702
      %v847 = vpop.f32.mrf.mxu0
      %v848 = vadd.f32 0.0, %v847
      %v849 = vpop.f32.mrf.mxu0
      %v850 = vpop.f32.mrf.mxu0
      %v851 = vadd.f32 0.0, %v850
      %v852 = vpop.f32.mrf.mxu0
      %853 = vmatprep.mubr.bf16.mxu0 0
      %854 = vmatmul.mubr.bf16.gmra.mxu0 %v705
      %v855 = vpop.f32.mrf.mxu0
      %v856 = vadd.f32 0.0, %v855
      %v857 = vpop.f32.mrf.mxu0
      %v858 = vpop.f32.mrf.mxu0
      %v859 = vadd.f32 0.0, %v858
      %v860 = vpop.f32.mrf.mxu0
      %861 = vmatprep.mubr.bf16.mxu0 0
      %862 = vmatmul.mubr.bf16.gmra.mxu0 %v708
      %v863 = vpop.f32.mrf.mxu0
      %v864 = vadd.f32 0.0, %v863
      %v865 = vpop.f32.mrf.mxu0
      %v866 = vpop.f32.mrf.mxu0
      %v867 = vadd.f32 0.0, %v866
      %v868 = vpop.f32.mrf.mxu0
      %869 = vmatprep.mubr.bf16.mxu0 0
      %870 = vmatmul.mubr.bf16.gmra.mxu0 %v711
      %v871 = vpop.f32.mrf.mxu0
      %v872 = vadd.f32 0.0, %v871
      %v873 = vpop.f32.mrf.mxu0
      %v874 = vpop.f32.mrf.mxu0
      %v875 = vadd.f32 0.0, %v874
      %v876 = vpop.f32.mrf.mxu0
      %877 = vdwg.mxu0
      %v910 = vunpack.c.l.b16 %v172
      %v911 = vunpack.c.l.b16 %v173
      %v912 = vunpack.c.l.b16 %v175
      %v913 = vunpack.c.l.b16 %v176
      %v914 = vunpack.c.l.b16 %v178
      %v915 = vunpack.c.l.b16 %v179
      %v916 = vunpack.c.l.b16 %v181
      %v917 = vunpack.c.l.b16 %v182
      %v918 = vunpack.c.l.b16 %v184
      %v919 = vunpack.c.l.b16 %v185
      %v920 = vunpack.c.l.b16 %v187
      %v921 = vunpack.c.l.b16 %v188
      %v922 = vunpack.c.l.b16 %v190
      %v923 = vunpack.c.l.b16 %v191
      %v924 = vunpack.c.l.b16 %v193
      %v925 = vunpack.c.l.b16 %v194
      %v926 = vunpack.c.l.b16 %v196
      %v927 = vunpack.c.l.b16 %v197
      %v928 = vunpack.c.l.b16 %v199
      %v929 = vunpack.c.l.b16 %v200
      %v930 = vunpack.c.l.b16 %v202
      %v931 = vunpack.c.l.b16 %v203
      %v932 = vunpack.c.l.b16 %v205
      %v933 = vunpack.c.l.b16 %v206
      %v934 = vunpack.c.l.b16 %v208
      %v935 = vunpack.c.l.b16 %v209
      %v936 = vunpack.c.l.b16 %v211
      %v937 = vunpack.c.l.b16 %v212
      %v938 = vunpack.c.l.b16 %v214
      %v939 = vunpack.c.l.b16 %v215
      %v940 = vunpack.c.l.b16 %v217
      %v941 = vunpack.c.l.b16 %v218
      %v942 = vpack.c.b16 %v911, %v910
      %v943 = vpack.c.b16 %v913, %v912
      %v944 = vpack.c.b16 %v915, %v914
      %v945 = vpack.c.b16 %v917, %v916
      %v946 = vpack.c.b16 %v919, %v918
      %v947 = vpack.c.b16 %v921, %v920
      %v948 = vpack.c.b16 %v923, %v922
      %v949 = vpack.c.b16 %v925, %v924
      %v950 = vpack.c.b16 %v927, %v926
      %v951 = vpack.c.b16 %v929, %v928
      %v952 = vpack.c.b16 %v931, %v930
      %v953 = vpack.c.b16 %v933, %v932
      %v954 = vpack.c.b16 %v935, %v934
      %v955 = vpack.c.b16 %v937, %v936
      %v956 = vpack.c.b16 %v939, %v938
      %v957 = vpack.c.b16 %v941, %v940
      %v959 = vsel %vm664, %v942, 0
      %v962 = vsel %vm664, %v943, 0
      %v965 = vsel %vm664, %v944, 0
      %v968 = vsel %vm664, %v945, 0
      %v971 = vsel %vm664, %v946, 0
      %v974 = vsel %vm664, %v947, 0
      %v977 = vsel %vm664, %v948, 0
      %v980 = vsel %vm664, %v949, 0
      %v983 = vsel %vm664, %v950, 0
      %v986 = vsel %vm664, %v951, 0
      %v989 = vsel %vm664, %v952, 0
      %v992 = vsel %vm664, %v953, 0
      %v995 = vsel %vm664, %v954, 0
      %v998 = vsel %vm664, %v955, 0
      %v1001 = vsel %vm664, %v956, 0
      %v1004 = vsel %vm664, %v957, 0
      %v1007 = vsel %vm713, %v226, 0
      %1009 = vmatprep.subr.bf16.mxu0 0
      %1010 = vmatpush1.bf16.msra.mxu0 0
      %1011 = vmatprep.subr.bf16.mxu0 0
      %1012 = vmatpush1.bf16.msra.mxu0 0
      %1013 = vmatprep.subr.bf16.mxu0 0
      %1014 = vmatpush1.bf16.msra.mxu0 0
      %1015 = vmatprep.subr.bf16.mxu0 0
      %1016 = vmatpush1.bf16.msra.mxu0 0
      %1017 = vmatprep.subr.bf16.mxu0 0
      %1018 = vmatpush1.bf16.msra.mxu0 0
      %1019 = vmatprep.subr.bf16.mxu0 0
      %1020 = vmatpush1.bf16.msra.mxu0 0
      %1021 = vmatprep.subr.bf16.mxu0 0
      %1022 = vmatpush1.bf16.msra.mxu0 0
      %1023 = vmatprep.subr.bf16.mxu0 0
      %1024 = vmatpush1.bf16.msra.mxu0 %v1007
      %1025 = vmatprep.subr.bf16.mxu0 0
      %1026 = vmatpush2.bf16.msra.mxu0 0
      %1027 = vmatprep.subr.bf16.mxu0 0
      %1028 = vmatpush2.bf16.msra.mxu0 0
      %1029 = vmatprep.subr.bf16.mxu0 0
      %1030 = vmatpush2.bf16.msra.mxu0 0
      %1031 = vmatprep.subr.bf16.mxu0 0
      %1032 = vmatpush2.bf16.msra.mxu0 0
      %1033 = vmatprep.subr.bf16.mxu0 0
      %1034 = vmatpush2.bf16.msra.mxu0 0
      %1035 = vmatprep.subr.bf16.mxu0 0
      %1036 = vmatpush2.bf16.msra.mxu0 0
      %1037 = vmatprep.subr.bf16.mxu0 0
      %1038 = vmatpush2.bf16.msra.mxu0 0
      %1039 = vmatprep.subr.bf16.mxu0 0
      %1040 = vmatpush2.bf16.msra.mxu0 0
      %1041 = vmatprep.mubr.bf16.mxu0 0
      %1042 = vmatmul.mubr.bf16.gmra.mxu0 %v959
      %v1043 = vpop.f32.mrf.mxu0
      %v1044 = vadd.f32 %v752, %v1043
      %v1045 = vpop.f32.mrf.mxu0
      %v1046 = vpop.f32.mrf.mxu0
      %v1047 = vadd.f32 %v755, %v1046
      %v1048 = vpop.f32.mrf.mxu0
      %1049 = vmatprep.mubr.bf16.mxu0 0
      %1050 = vmatmul.mubr.bf16.gmra.mxu0 %v962
      %v1051 = vpop.f32.mrf.mxu0
      %v1052 = vadd.f32 %v760, %v1051
      %v1053 = vpop.f32.mrf.mxu0
      %v1054 = vpop.f32.mrf.mxu0
      %v1055 = vadd.f32 %v763, %v1054
      %v1056 = vpop.f32.mrf.mxu0
      %1057 = vmatprep.mubr.bf16.mxu0 0
      %1058 = vmatmul.mubr.bf16.gmra.mxu0 %v965
      %v1059 = vpop.f32.mrf.mxu0
      %v1060 = vadd.f32 %v768, %v1059
      %v1061 = vpop.f32.mrf.mxu0
      %v1062 = vpop.f32.mrf.mxu0
      %v1063 = vadd.f32 %v771, %v1062
      %v1064 = vpop.f32.mrf.mxu0
      %1065 = vmatprep.mubr.bf16.mxu0 0
      %1066 = vmatmul.mubr.bf16.gmra.mxu0 %v968
      %v1067 = vpop.f32.mrf.mxu0
      %v1068 = vadd.f32 %v776, %v1067
      %v1069 = vpop.f32.mrf.mxu0
      %v1070 = vpop.f32.mrf.mxu0
      %v1071 = vadd.f32 %v779, %v1070
      %v1072 = vpop.f32.mrf.mxu0
      %1073 = vmatprep.mubr.bf16.mxu0 0
      %1074 = vmatmul.mubr.bf16.gmra.mxu0 %v971
      %v1075 = vpop.f32.mrf.mxu0
      %v1076 = vadd.f32 %v784, %v1075
      %v1077 = vpop.f32.mrf.mxu0
      %v1078 = vpop.f32.mrf.mxu0
      %v1079 = vadd.f32 %v787, %v1078
      %v1080 = vpop.f32.mrf.mxu0
      %1081 = vmatprep.mubr.bf16.mxu0 0
      %1082 = vmatmul.mubr.bf16.gmra.mxu0 %v974
      %v1083 = vpop.f32.mrf.mxu0
      %v1084 = vadd.f32 %v792, %v1083
      %v1085 = vpop.f32.mrf.mxu0
      %v1086 = vpop.f32.mrf.mxu0
      %v1087 = vadd.f32 %v795, %v1086
      %v1088 = vpop.f32.mrf.mxu0
      %1089 = vmatprep.mubr.bf16.mxu0 0
      %1090 = vmatmul.mubr.bf16.gmra.mxu0 %v977
      %v1091 = vpop.f32.mrf.mxu0
      %v1092 = vadd.f32 %v800, %v1091
      %v1093 = vpop.f32.mrf.mxu0
      %v1094 = vpop.f32.mrf.mxu0
      %v1095 = vadd.f32 %v803, %v1094
      %v1096 = vpop.f32.mrf.mxu0
      %1097 = vmatprep.mubr.bf16.mxu0 0
      %1098 = vmatmul.mubr.bf16.gmra.mxu0 %v980
      %v1099 = vpop.f32.mrf.mxu0
      %v1100 = vadd.f32 %v808, %v1099
      %v1101 = vpop.f32.mrf.mxu0
      %v1102 = vpop.f32.mrf.mxu0
      %v1103 = vadd.f32 %v811, %v1102
      %v1104 = vpop.f32.mrf.mxu0
      %1105 = vmatprep.mubr.bf16.mxu0 0
      %1106 = vmatmul.mubr.bf16.gmra.mxu0 %v983
      %v1107 = vpop.f32.mrf.mxu0
      %v1108 = vadd.f32 %v816, %v1107
      %v1109 = vpop.f32.mrf.mxu0
      %v1110 = vpop.f32.mrf.mxu0
      %v1111 = vadd.f32 %v819, %v1110
      %v1112 = vpop.f32.mrf.mxu0
      %1113 = vmatprep.mubr.bf16.mxu0 0
      %1114 = vmatmul.mubr.bf16.gmra.mxu0 %v986
      %v1115 = vpop.f32.mrf.mxu0
      %v1116 = vadd.f32 %v824, %v1115
      %v1117 = vpop.f32.mrf.mxu0
      %v1118 = vpop.f32.mrf.mxu0
      %v1119 = vadd.f32 %v827, %v1118
      %v1120 = vpop.f32.mrf.mxu0
      %1121 = vmatprep.mubr.bf16.mxu0 0
      %1122 = vmatmul.mubr.bf16.gmra.mxu0 %v989
      %v1123 = vpop.f32.mrf.mxu0
      %v1124 = vadd.f32 %v832, %v1123
      %v1125 = vpop.f32.mrf.mxu0
      %v1126 = vpop.f32.mrf.mxu0
      %v1127 = vadd.f32 %v835, %v1126
      %v1128 = vpop.f32.mrf.mxu0
      %1129 = vmatprep.mubr.bf16.mxu0 0
      %1130 = vmatmul.mubr.bf16.gmra.mxu0 %v992
      %v1131 = vpop.f32.mrf.mxu0
      %v1132 = vadd.f32 %v840, %v1131
      %v1133 = vpop.f32.mrf.mxu0
      %v1134 = vpop.f32.mrf.mxu0
      %v1135 = vadd.f32 %v843, %v1134
      %v1136 = vpop.f32.mrf.mxu0
      %1137 = vmatprep.mubr.bf16.mxu0 0
      %1138 = vmatmul.mubr.bf16.gmra.mxu0 %v995
      %v1139 = vpop.f32.mrf.mxu0
      %v1140 = vadd.f32 %v848, %v1139
      %v1141 = vpop.f32.mrf.mxu0
      %v1142 = vpop.f32.mrf.mxu0
      %v1143 = vadd.f32 %v851, %v1142
      %v1144 = vpop.f32.mrf.mxu0
      %1145 = vmatprep.mubr.bf16.mxu0 0
      %1146 = vmatmul.mubr.bf16.gmra.mxu0 %v998
      %v1147 = vpop.f32.mrf.mxu0
      %v1148 = vadd.f32 %v856, %v1147
      %v1149 = vpop.f32.mrf.mxu0
      %v1150 = vpop.f32.mrf.mxu0
      %v1151 = vadd.f32 %v859, %v1150
      %v1152 = vpop.f32.mrf.mxu0
      %1153 = vmatprep.mubr.bf16.mxu0 0
      %1154 = vmatmul.mubr.bf16.gmra.mxu0 %v1001
      %v1155 = vpop.f32.mrf.mxu0
      %v1156 = vadd.f32 %v864, %v1155
      %v1157 = vpop.f32.mrf.mxu0
      %v1158 = vpop.f32.mrf.mxu0
      %v1159 = vadd.f32 %v867, %v1158
      %v1160 = vpop.f32.mrf.mxu0
      %1161 = vmatprep.mubr.bf16.mxu0 0
      %1162 = vmatmul.mubr.bf16.gmra.mxu0 %v1004
      %v1163 = vpop.f32.mrf.mxu0
      %v1164 = vadd.f32 %v872, %v1163
      %v1165 = vpop.f32.mrf.mxu0
      %v1166 = vpop.f32.mrf.mxu0
      %v1167 = vadd.f32 %v875, %v1166
      %v1168 = vpop.f32.mrf.mxu0
      %1169 = vdwg.mxu0
      %vm1186 = vcmask 1042432
      %vm1187 = vcmask 1046532
      %vm1188 = vmor %vm1186, %vm1187
      %v1189 = vrot.slane %v172, 5
      %v1190 = vrot.slane %v1189, 4
      %v1191 = vrot.slane %v173, 5
      %v1192 = vsel %vm1188, %v1190, %v1191
      %v1193 = vrot.slane %v1191, 4
      %v1194 = vrot.slane %v174, 5
      %v1195 = vsel %vm1188, %v1193, %v1194
      %v1196 = vrot.slane %v175, 5
      %v1197 = vrot.slane %v1196, 4
      %v1198 = vrot.slane %v176, 5
      %v1199 = vsel %vm1188, %v1197, %v1198
      %v1200 = vrot.slane %v1198, 4
      %v1201 = vrot.slane %v177, 5
      %v1202 = vsel %vm1188, %v1200, %v1201
      %v1203 = vrot.slane %v178, 5
      %v1204 = vrot.slane %v1203, 4
      %v1205 = vrot.slane %v179, 5
      %v1206 = vsel %vm1188, %v1204, %v1205
      %v1207 = vrot.slane %v1205, 4
      %v1208 = vrot.slane %v180, 5
      %v1209 = vsel %vm1188, %v1207, %v1208
      %v1210 = vrot.slane %v181, 5
      %v1211 = vrot.slane %v1210, 4
      %v1212 = vrot.slane %v182, 5
      %v1213 = vsel %vm1188, %v1211, %v1212
      %v1214 = vrot.slane %v1212, 4
      %v1215 = vrot.slane %v183, 5
      %v1216 = vsel %vm1188, %v1214, %v1215
      %v1217 = vrot.slane %v184, 5
      %v1218 = vrot.slane %v1217, 4
      %v1219 = vrot.slane %v185, 5
      %v1220 = vsel %vm1188, %v1218, %v1219
      %v1221 = vrot.slane %v1219, 4
      %v1222 = vrot.slane %v186, 5
      %v1223 = vsel %vm1188, %v1221, %v1222
      %v1224 = vrot.slane %v187, 5
      %v1225 = vrot.slane %v1224, 4
      %v1226 = vrot.slane %v188, 5
      %v1227 = vsel %vm1188, %v1225, %v1226
      %v1228 = vrot.slane %v1226, 4
      %v1229 = vrot.slane %v189, 5
      %v1230 = vsel %vm1188, %v1228, %v1229
      %v1231 = vrot.slane %v190, 5
      %v1232 = vrot.slane %v1231, 4
      %v1233 = vrot.slane %v191, 5
      %v1234 = vsel %vm1188, %v1232, %v1233
      %v1235 = vrot.slane %v1233, 4
      %v1236 = vrot.slane %v192, 5
      %v1237 = vsel %vm1188, %v1235, %v1236
      %v1238 = vrot.slane %v193, 5
      %v1239 = vrot.slane %v1238, 4
      %v1240 = vrot.slane %v194, 5
      %v1241 = vsel %vm1188, %v1239, %v1240
      %v1242 = vrot.slane %v1240, 4
      %v1243 = vrot.slane %v195, 5
      %v1244 = vsel %vm1188, %v1242, %v1243
      %v1245 = vrot.slane %v196, 5
      %v1246 = vrot.slane %v1245, 4
      %v1247 = vrot.slane %v197, 5
      %v1248 = vsel %vm1188, %v1246, %v1247
      %v1249 = vrot.slane %v1247, 4
      %v1250 = vrot.slane %v198, 5
      %v1251 = vsel %vm1188, %v1249, %v1250
      %v1252 = vrot.slane %v199, 5
      %v1253 = vrot.slane %v1252, 4
      %v1254 = vrot.slane %v200, 5
      %v1255 = vsel %vm1188, %v1253, %v1254
      %v1256 = vrot.slane %v1254, 4
      %v1257 = vrot.slane %v201, 5
      %v1258 = vsel %vm1188, %v1256, %v1257
      %v1259 = vrot.slane %v202, 5
      %v1260 = vrot.slane %v1259, 4
      %v1261 = vrot.slane %v203, 5
      %v1262 = vsel %vm1188, %v1260, %v1261
      %v1263 = vrot.slane %v1261, 4
      %v1264 = vrot.slane %v204, 5
      %v1265 = vsel %vm1188, %v1263, %v1264
      %v1266 = vrot.slane %v205, 5
      %v1267 = vrot.slane %v1266, 4
      %v1268 = vrot.slane %v206, 5
      %v1269 = vsel %vm1188, %v1267, %v1268
      %v1270 = vrot.slane %v1268, 4
      %v1271 = vrot.slane %v207, 5
      %v1272 = vsel %vm1188, %v1270, %v1271
      %v1273 = vrot.slane %v208, 5
      %v1274 = vrot.slane %v1273, 4
      %v1275 = vrot.slane %v209, 5
      %v1276 = vsel %vm1188, %v1274, %v1275
      %v1277 = vrot.slane %v1275, 4
      %v1278 = vrot.slane %v210, 5
      %v1279 = vsel %vm1188, %v1277, %v1278
      %v1280 = vrot.slane %v211, 5
      %v1281 = vrot.slane %v1280, 4
      %v1282 = vrot.slane %v212, 5
      %v1283 = vsel %vm1188, %v1281, %v1282
      %v1284 = vrot.slane %v1282, 4
      %v1285 = vrot.slane %v213, 5
      %v1286 = vsel %vm1188, %v1284, %v1285
      %v1287 = vrot.slane %v214, 5
      %v1288 = vrot.slane %v1287, 4
      %v1289 = vrot.slane %v215, 5
      %v1290 = vsel %vm1188, %v1288, %v1289
      %v1291 = vrot.slane %v1289, 4
      %v1292 = vrot.slane %v216, 5
      %v1293 = vsel %vm1188, %v1291, %v1292
      %v1294 = vrot.slane %v217, 5
      %v1295 = vrot.slane %v1294, 4
      %v1296 = vrot.slane %v218, 5
      %v1297 = vsel %vm1188, %v1295, %v1296
      %v1298 = vrot.slane %v1296, 4
      %v1299 = vrot.slane %v219, 5
      %v1300 = vsel %vm1188, %v1298, %v1299
      %s1301 = scalar_lea.vmem %s1, 4
      %v1302 = vld [vmem:[%s1301] sm:$0x3]
      %v1303 = vunpack.c.l.b16 %v1192
      %v1304 = vunpack.c.l.b16 %v1195
      %v1305 = vunpack.c.l.b16 %v1199
      %v1306 = vunpack.c.l.b16 %v1202
      %v1307 = vunpack.c.l.b16 %v1206
      %v1308 = vunpack.c.l.b16 %v1209
      %v1309 = vunpack.c.l.b16 %v1213
      %v1310 = vunpack.c.l.b16 %v1216
      %v1311 = vunpack.c.l.b16 %v1220
      %v1312 = vunpack.c.l.b16 %v1223
      %v1313 = vunpack.c.l.b16 %v1227
      %v1314 = vunpack.c.l.b16 %v1230
      %v1315 = vunpack.c.l.b16 %v1234
      %v1316 = vunpack.c.l.b16 %v1237
      %v1317 = vunpack.c.l.b16 %v1241
      %v1318 = vunpack.c.l.b16 %v1244
      %v1319 = vunpack.c.l.b16 %v1248
      %v1320 = vunpack.c.l.b16 %v1251
      %v1321 = vunpack.c.l.b16 %v1255
      %v1322 = vunpack.c.l.b16 %v1258
      %v1323 = vunpack.c.l.b16 %v1262
      %v1324 = vunpack.c.l.b16 %v1265
      %v1325 = vunpack.c.l.b16 %v1269
      %v1326 = vunpack.c.l.b16 %v1272
      %v1327 = vunpack.c.l.b16 %v1276
      %v1328 = vunpack.c.l.b16 %v1279
      %v1329 = vunpack.c.l.b16 %v1283
      %v1330 = vunpack.c.l.b16 %v1286
      %v1331 = vunpack.c.l.b16 %v1290
      %v1332 = vunpack.c.l.b16 %v1293
      %v1333 = vunpack.c.l.b16 %v1297
      %v1334 = vunpack.c.l.b16 %v1300
      %v1335 = vpack.c.b16 %v1304, %v1303
      %v1336 = vpack.c.b16 %v1306, %v1305
      %v1337 = vpack.c.b16 %v1308, %v1307
      %v1338 = vpack.c.b16 %v1310, %v1309
      %v1339 = vpack.c.b16 %v1312, %v1311
      %v1340 = vpack.c.b16 %v1314, %v1313
      %v1341 = vpack.c.b16 %v1316, %v1315
      %v1342 = vpack.c.b16 %v1318, %v1317
      %v1343 = vpack.c.b16 %v1320, %v1319
      %v1344 = vpack.c.b16 %v1322, %v1321
      %v1345 = vpack.c.b16 %v1324, %v1323
      %v1346 = vpack.c.b16 %v1326, %v1325
      %v1347 = vpack.c.b16 %v1328, %v1327
      %v1348 = vpack.c.b16 %v1330, %v1329
      %v1349 = vpack.c.b16 %v1332, %v1331
      %v1350 = vpack.c.b16 %v1334, %v1333
      %v1352 = vsel %vm664, %v1335, 0
      %v1355 = vsel %vm664, %v1336, 0
      %v1358 = vsel %vm664, %v1337, 0
      %v1361 = vsel %vm664, %v1338, 0
      %v1364 = vsel %vm664, %v1339, 0
      %v1367 = vsel %vm664, %v1340, 0
      %v1370 = vsel %vm664, %v1341, 0
      %v1373 = vsel %vm664, %v1342, 0
      %v1376 = vsel %vm664, %v1343, 0
      %v1379 = vsel %vm664, %v1344, 0
      %v1382 = vsel %vm664, %v1345, 0
      %v1385 = vsel %vm664, %v1346, 0
      %v1388 = vsel %vm664, %v1347, 0
      %v1391 = vsel %vm664, %v1348, 0
      %v1394 = vsel %vm664, %v1349, 0
      %v1397 = vsel %vm664, %v1350, 0
      %v1400 = vsel %vm713, %v1302, 0
      %1402 = vmatprep.subr.bf16.mxu0 0
      %1403 = vmatpush1.bf16.msra.mxu0 0
      %1404 = vmatprep.subr.bf16.mxu0 0
      %1405 = vmatpush1.bf16.msra.mxu0 0
      %1406 = vmatprep.subr.bf16.mxu0 0
      %1407 = vmatpush1.bf16.msra.mxu0 0
      %1408 = vmatprep.subr.bf16.mxu0 0
      %1409 = vmatpush1.bf16.msra.mxu0 0
      %1410 = vmatprep.subr.bf16.mxu0 0
      %1411 = vmatpush1.bf16.msra.mxu0 0
      %1412 = vmatprep.subr.bf16.mxu0 0
      %1413 = vmatpush1.bf16.msra.mxu0 0
      %1414 = vmatprep.subr.bf16.mxu0 0
      %1415 = vmatpush1.bf16.msra.mxu0 0
      %1416 = vmatprep.subr.bf16.mxu0 0
      %1417 = vmatpush1.bf16.msra.mxu0 %v1400
      %1418 = vmatprep.subr.bf16.mxu0 0
      %1419 = vmatpush2.bf16.msra.mxu0 0
      %1420 = vmatprep.subr.bf16.mxu0 0
      %1421 = vmatpush2.bf16.msra.mxu0 0
      %1422 = vmatprep.subr.bf16.mxu0 0
      %1423 = vmatpush2.bf16.msra.mxu0 0
      %1424 = vmatprep.subr.bf16.mxu0 0
      %1425 = vmatpush2.bf16.msra.mxu0 0
      %1426 = vmatprep.subr.bf16.mxu0 0
      %1427 = vmatpush2.bf16.msra.mxu0 0
      %1428 = vmatprep.subr.bf16.mxu0 0
      %1429 = vmatpush2.bf16.msra.mxu0 0
      %1430 = vmatprep.subr.bf16.mxu0 0
      %1431 = vmatpush2.bf16.msra.mxu0 0
      %1432 = vmatprep.subr.bf16.mxu0 0
      %1433 = vmatpush2.bf16.msra.mxu0 0
      %1434 = vmatprep.mubr.bf16.mxu0 0
      %1435 = vmatmul.mubr.bf16.gmra.mxu0 %v1352
      %v1436 = vpop.f32.mrf.mxu0
      %v1437 = vadd.f32 0.0, %v1436
      %v1438 = vpop.f32.mrf.mxu0
      %v1439 = vpop.f32.mrf.mxu0
      %v1440 = vadd.f32 0.0, %v1439
      %v1441 = vpop.f32.mrf.mxu0
      %1442 = vmatprep.mubr.bf16.mxu0 0
      %1443 = vmatmul.mubr.bf16.gmra.mxu0 %v1355
      %v1444 = vpop.f32.mrf.mxu0
      %v1445 = vadd.f32 0.0, %v1444
      %v1446 = vpop.f32.mrf.mxu0
      %v1447 = vpop.f32.mrf.mxu0
      %v1448 = vadd.f32 0.0, %v1447
      %v1449 = vpop.f32.mrf.mxu0
      %1450 = vmatprep.mubr.bf16.mxu0 0
      %1451 = vmatmul.mubr.bf16.gmra.mxu0 %v1358
      %v1452 = vpop.f32.mrf.mxu0
      %v1453 = vadd.f32 0.0, %v1452
      %v1454 = vpop.f32.mrf.mxu0
      %v1455 = vpop.f32.mrf.mxu0
      %v1456 = vadd.f32 0.0, %v1455
      %v1457 = vpop.f32.mrf.mxu0
      %1458 = vmatprep.mubr.bf16.mxu0 0
      %1459 = vmatmul.mubr.bf16.gmra.mxu0 %v1361
      %v1460 = vpop.f32.mrf.mxu0
      %v1461 = vadd.f32 0.0, %v1460
      %v1462 = vpop.f32.mrf.mxu0
      %v1463 = vpop.f32.mrf.mxu0
      %v1464 = vadd.f32 0.0, %v1463
      %v1465 = vpop.f32.mrf.mxu0
      %1466 = vmatprep.mubr.bf16.mxu0 0
      %1467 = vmatmul.mubr.bf16.gmra.mxu0 %v1364
      %v1468 = vpop.f32.mrf.mxu0
      %v1469 = vadd.f32 0.0, %v1468
      %v1470 = vpop.f32.mrf.mxu0
      %v1471 = vpop.f32.mrf.mxu0
      %v1472 = vadd.f32 0.0, %v1471
      %v1473 = vpop.f32.mrf.mxu0
      %1474 = vmatprep.mubr.bf16.mxu0 0
      %1475 = vmatmul.mubr.bf16.gmra.mxu0 %v1367
      %v1476 = vpop.f32.mrf.mxu0
      %v1477 = vadd.f32 0.0, %v1476
      %v1478 = vpop.f32.mrf.mxu0
      %v1479 = vpop.f32.mrf.mxu0
      %v1480 = vadd.f32 0.0, %v1479
      %v1481 = vpop.f32.mrf.mxu0
      %1482 = vmatprep.mubr.bf16.mxu0 0
      %1483 = vmatmul.mubr.bf16.gmra.mxu0 %v1370
      %v1484 = vpop.f32.mrf.mxu0
      %v1485 = vadd.f32 0.0, %v1484
      %v1486 = vpop.f32.mrf.mxu0
      %v1487 = vpop.f32.mrf.mxu0
      %v1488 = vadd.f32 0.0, %v1487
      %v1489 = vpop.f32.mrf.mxu0
      %1490 = vmatprep.mubr.bf16.mxu0 0
      %1491 = vmatmul.mubr.bf16.gmra.mxu0 %v1373
      %v1492 = vpop.f32.mrf.mxu0
      %v1493 = vadd.f32 0.0, %v1492
      %v1494 = vpop.f32.mrf.mxu0
      %v1495 = vpop.f32.mrf.mxu0
      %v1496 = vadd.f32 0.0, %v1495
      %v1497 = vpop.f32.mrf.mxu0
      %1498 = vmatprep.mubr.bf16.mxu0 0
      %1499 = vmatmul.mubr.bf16.gmra.mxu0 %v1376
      %v1500 = vpop.f32.mrf.mxu0
      %v1501 = vadd.f32 0.0, %v1500
      %v1502 = vpop.f32.mrf.mxu0
      %v1503 = vpop.f32.mrf.mxu0
      %v1504 = vadd.f32 0.0, %v1503
      %v1505 = vpop.f32.mrf.mxu0
      %1506 = vmatprep.mubr.bf16.mxu0 0
      %1507 = vmatmul.mubr.bf16.gmra.mxu0 %v1379
      %v1508 = vpop.f32.mrf.mxu0
      %v1509 = vadd.f32 0.0, %v1508
      %v1510 = vpop.f32.mrf.mxu0
      %v1511 = vpop.f32.mrf.mxu0
      %v1512 = vadd.f32 0.0, %v1511
      %v1513 = vpop.f32.mrf.mxu0
      %1514 = vmatprep.mubr.bf16.mxu0 0
      %1515 = vmatmul.mubr.bf16.gmra.mxu0 %v1382
      %v1516 = vpop.f32.mrf.mxu0
      %v1517 = vadd.f32 0.0, %v1516
      %v1518 = vpop.f32.mrf.mxu0
      %v1519 = vpop.f32.mrf.mxu0
      %v1520 = vadd.f32 0.0, %v1519
      %v1521 = vpop.f32.mrf.mxu0
      %1522 = vmatprep.mubr.bf16.mxu0 0
      %1523 = vmatmul.mubr.bf16.gmra.mxu0 %v1385
      %v1524 = vpop.f32.mrf.mxu0
      %v1525 = vadd.f32 0.0, %v1524
      %v1526 = vpop.f32.mrf.mxu0
      %v1527 = vpop.f32.mrf.mxu0
      %v1528 = vadd.f32 0.0, %v1527
      %v1529 = vpop.f32.mrf.mxu0
      %1530 = vmatprep.mubr.bf16.mxu0 0
      %1531 = vmatmul.mubr.bf16.gmra.mxu0 %v1388
      %v1532 = vpop.f32.mrf.mxu0
      %v1533 = vadd.f32 0.0, %v1532
      %v1534 = vpop.f32.mrf.mxu0
      %v1535 = vpop.f32.mrf.mxu0
      %v1536 = vadd.f32 0.0, %v1535
      %v1537 = vpop.f32.mrf.mxu0
      %1538 = vmatprep.mubr.bf16.mxu0 0
      %1539 = vmatmul.mubr.bf16.gmra.mxu0 %v1391
      %v1540 = vpop.f32.mrf.mxu0
      %v1541 = vadd.f32 0.0, %v1540
      %v1542 = vpop.f32.mrf.mxu0
      %v1543 = vpop.f32.mrf.mxu0
      %v1544 = vadd.f32 0.0, %v1543
      %v1545 = vpop.f32.mrf.mxu0
      %1546 = vmatprep.mubr.bf16.mxu0 0
      %1547 = vmatmul.mubr.bf16.gmra.mxu0 %v1394
      %v1548 = vpop.f32.mrf.mxu0
      %v1549 = vadd.f32 0.0, %v1548
      %v1550 = vpop.f32.mrf.mxu0
      %v1551 = vpop.f32.mrf.mxu0
      %v1552 = vadd.f32 0.0, %v1551
      %v1553 = vpop.f32.mrf.mxu0
      %1554 = vmatprep.mubr.bf16.mxu0 0
      %1555 = vmatmul.mubr.bf16.gmra.mxu0 %v1397
      %v1556 = vpop.f32.mrf.mxu0
      %v1557 = vadd.f32 0.0, %v1556
      %v1558 = vpop.f32.mrf.mxu0
      %v1559 = vpop.f32.mrf.mxu0
      %v1560 = vadd.f32 0.0, %v1559
      %v1561 = vpop.f32.mrf.mxu0
      %1562 = vdwg.mxu0
      %v1563 = vadd.f32 %v1044, %v1437
      %v1564 = vadd.f32 %v1047, %v1440
      %v1565 = vadd.f32 %v1052, %v1445
      %v1566 = vadd.f32 %v1055, %v1448
      %v1567 = vadd.f32 %v1060, %v1453
      %v1568 = vadd.f32 %v1063, %v1456
      %v1569 = vadd.f32 %v1068, %v1461
      %v1570 = vadd.f32 %v1071, %v1464
      %v1571 = vadd.f32 %v1076, %v1469
      %v1572 = vadd.f32 %v1079, %v1472
      %v1573 = vadd.f32 %v1084, %v1477
      %v1574 = vadd.f32 %v1087, %v1480
      %v1575 = vadd.f32 %v1092, %v1485
      %v1576 = vadd.f32 %v1095, %v1488
      %v1577 = vadd.f32 %v1100, %v1493
      %v1578 = vadd.f32 %v1103, %v1496
      %v1579 = vadd.f32 %v1108, %v1501
      %v1580 = vadd.f32 %v1111, %v1504
      %v1581 = vadd.f32 %v1116, %v1509
      %v1582 = vadd.f32 %v1119, %v1512
      %v1583 = vadd.f32 %v1124, %v1517
      %v1584 = vadd.f32 %v1127, %v1520
      %v1585 = vadd.f32 %v1132, %v1525
      %v1586 = vadd.f32 %v1135, %v1528
      %v1587 = vadd.f32 %v1140, %v1533
      %v1588 = vadd.f32 %v1143, %v1536
      %v1589 = vadd.f32 %v1148, %v1541
      %v1590 = vadd.f32 %v1151, %v1544
      %v1591 = vadd.f32 %v1156, %v1549
      %v1592 = vadd.f32 %v1159, %v1552
      %v1593 = vadd.f32 %v1164, %v1557
      %v1594 = vadd.f32 %v1167, %v1560
      %s1595 = scalar_lea.vmem %s1, 6
      %v1596 = vld [vmem:[%s1595] sm:$0x3]
      %v1599 = vunpack.c.l.b16 %v220
      %v1600 = vunpack.c.l.b16 %v221
      %v1601 = vpack.c.b16 %v1600, %v1599
      %v1603 = vsel %vm664, %v1601, 0
      %v1606 = vsel %vm713, %v1596, 0
      %1608 = vmatprep.subr.bf16.mxu0 0
      %1609 = vmatpush1.bf16.msra.mxu0 0
      %1610 = vmatprep.subr.bf16.mxu0 0
      %1611 = vmatpush1.bf16.msra.mxu0 0
      %1612 = vmatprep.subr.bf16.mxu0 0
      %1613 = vmatpush1.bf16.msra.mxu0 0
      %1614 = vmatprep.subr.bf16.mxu0 0
      %1615 = vmatpush1.bf16.msra.mxu0 0
      %1616 = vmatprep.subr.bf16.mxu0 0
      %1617 = vmatpush1.bf16.msra.mxu0 0
      %1618 = vmatprep.subr.bf16.mxu0 0
      %1619 = vmatpush1.bf16.msra.mxu0 0
      %1620 = vmatprep.subr.bf16.mxu0 0
      %1621 = vmatpush1.bf16.msra.mxu0 0
      %1622 = vmatprep.subr.bf16.mxu0 0
      %1623 = vmatpush1.bf16.msra.mxu0 %v1606
      %1624 = vmatprep.subr.bf16.mxu0 0
      %1625 = vmatpush2.bf16.msra.mxu0 0
      %1626 = vmatprep.subr.bf16.mxu0 0
      %1627 = vmatpush2.bf16.msra.mxu0 0
      %1628 = vmatprep.subr.bf16.mxu0 0
      %1629 = vmatpush2.bf16.msra.mxu0 0
      %1630 = vmatprep.subr.bf16.mxu0 0
      %1631 = vmatpush2.bf16.msra.mxu0 0
      %1632 = vmatprep.subr.bf16.mxu0 0
      %1633 = vmatpush2.bf16.msra.mxu0 0
      %1634 = vmatprep.subr.bf16.mxu0 0
      %1635 = vmatpush2.bf16.msra.mxu0 0
      %1636 = vmatprep.subr.bf16.mxu0 0
      %1637 = vmatpush2.bf16.msra.mxu0 0
      %1638 = vmatprep.subr.bf16.mxu0 0
      %1639 = vmatpush2.bf16.msra.mxu0 0
      %1640 = vmatprep.mubr.bf16.mxu0 0
      %1641 = vmatmul.mubr.bf16.gmra.mxu0 %v962
      %v1642 = vpop.f32.mrf.mxu0
      %v1643 = vadd.f32 0.0, %v1642
      %v1644 = vpop.f32.mrf.mxu0
      %v1645 = vpop.f32.mrf.mxu0
      %v1646 = vadd.f32 0.0, %v1645
      %v1647 = vpop.f32.mrf.mxu0
      %1648 = vmatprep.mubr.bf16.mxu0 0
      %1649 = vmatmul.mubr.bf16.gmra.mxu0 %v965
      %v1650 = vpop.f32.mrf.mxu0
      %v1651 = vadd.f32 0.0, %v1650
      %v1652 = vpop.f32.mrf.mxu0
      %v1653 = vpop.f32.mrf.mxu0
      %v1654 = vadd.f32 0.0, %v1653
      %v1655 = vpop.f32.mrf.mxu0
      %1656 = vmatprep.mubr.bf16.mxu0 0
      %1657 = vmatmul.mubr.bf16.gmra.mxu0 %v968
      %v1658 = vpop.f32.mrf.mxu0
      %v1659 = vadd.f32 0.0, %v1658
      %v1660 = vpop.f32.mrf.mxu0
      %v1661 = vpop.f32.mrf.mxu0
      %v1662 = vadd.f32 0.0, %v1661
      %v1663 = vpop.f32.mrf.mxu0
      %1664 = vmatprep.mubr.bf16.mxu0 0
      %1665 = vmatmul.mubr.bf16.gmra.mxu0 %v971
      %v1666 = vpop.f32.mrf.mxu0
      %v1667 = vadd.f32 0.0, %v1666
      %v1668 = vpop.f32.mrf.mxu0
      %v1669 = vpop.f32.mrf.mxu0
      %v1670 = vadd.f32 0.0, %v1669
      %v1671 = vpop.f32.mrf.mxu0
      %1672 = vmatprep.mubr.bf16.mxu0 0
      %1673 = vmatmul.mubr.bf16.gmra.mxu0 %v974
      %v1674 = vpop.f32.mrf.mxu0
      %v1675 = vadd.f32 0.0, %v1674
      %v1676 = vpop.f32.mrf.mxu0
      %v1677 = vpop.f32.mrf.mxu0
      %v1678 = vadd.f32 0.0, %v1677
      %v1679 = vpop.f32.mrf.mxu0
      %1680 = vmatprep.mubr.bf16.mxu0 0
      %1681 = vmatmul.mubr.bf16.gmra.mxu0 %v977
      %v1682 = vpop.f32.mrf.mxu0
      %v1683 = vadd.f32 0.0, %v1682
      %v1684 = vpop.f32.mrf.mxu0
      %v1685 = vpop.f32.mrf.mxu0
      %v1686 = vadd.f32 0.0, %v1685
      %v1687 = vpop.f32.mrf.mxu0
      %1688 = vmatprep.mubr.bf16.mxu0 0
      %1689 = vmatmul.mubr.bf16.gmra.mxu0 %v980
      %v1690 = vpop.f32.mrf.mxu0
      %v1691 = vadd.f32 0.0, %v1690
      %v1692 = vpop.f32.mrf.mxu0
      %v1693 = vpop.f32.mrf.mxu0
      %v1694 = vadd.f32 0.0, %v1693
      %v1695 = vpop.f32.mrf.mxu0
      %1696 = vmatprep.mubr.bf16.mxu0 0
      %1697 = vmatmul.mubr.bf16.gmra.mxu0 %v983
      %v1698 = vpop.f32.mrf.mxu0
      %v1699 = vadd.f32 0.0, %v1698
      %v1700 = vpop.f32.mrf.mxu0
      %v1701 = vpop.f32.mrf.mxu0
      %v1702 = vadd.f32 0.0, %v1701
      %v1703 = vpop.f32.mrf.mxu0
      %1704 = vmatprep.mubr.bf16.mxu0 0
      %1705 = vmatmul.mubr.bf16.gmra.mxu0 %v986
      %v1706 = vpop.f32.mrf.mxu0
      %v1707 = vadd.f32 0.0, %v1706
      %v1708 = vpop.f32.mrf.mxu0
      %v1709 = vpop.f32.mrf.mxu0
      %v1710 = vadd.f32 0.0, %v1709
      %v1711 = vpop.f32.mrf.mxu0
      %1712 = vmatprep.mubr.bf16.mxu0 0
      %1713 = vmatmul.mubr.bf16.gmra.mxu0 %v989
      %v1714 = vpop.f32.mrf.mxu0
      %v1715 = vadd.f32 0.0, %v1714
      %v1716 = vpop.f32.mrf.mxu0
      %v1717 = vpop.f32.mrf.mxu0
      %v1718 = vadd.f32 0.0, %v1717
      %v1719 = vpop.f32.mrf.mxu0
      %1720 = vmatprep.mubr.bf16.mxu0 0
      %1721 = vmatmul.mubr.bf16.gmra.mxu0 %v992
      %v1722 = vpop.f32.mrf.mxu0
      %v1723 = vadd.f32 0.0, %v1722
      %v1724 = vpop.f32.mrf.mxu0
      %v1725 = vpop.f32.mrf.mxu0
      %v1726 = vadd.f32 0.0, %v1725
      %v1727 = vpop.f32.mrf.mxu0
      %1728 = vmatprep.mubr.bf16.mxu0 0
      %1729 = vmatmul.mubr.bf16.gmra.mxu0 %v995
      %v1730 = vpop.f32.mrf.mxu0
      %v1731 = vadd.f32 0.0, %v1730
      %v1732 = vpop.f32.mrf.mxu0
      %v1733 = vpop.f32.mrf.mxu0
      %v1734 = vadd.f32 0.0, %v1733
      %v1735 = vpop.f32.mrf.mxu0
      %1736 = vmatprep.mubr.bf16.mxu0 0
      %1737 = vmatmul.mubr.bf16.gmra.mxu0 %v998
      %v1738 = vpop.f32.mrf.mxu0
      %v1739 = vadd.f32 0.0, %v1738
      %v1740 = vpop.f32.mrf.mxu0
      %v1741 = vpop.f32.mrf.mxu0
      %v1742 = vadd.f32 0.0, %v1741
      %v1743 = vpop.f32.mrf.mxu0
      %1744 = vmatprep.mubr.bf16.mxu0 0
      %1745 = vmatmul.mubr.bf16.gmra.mxu0 %v1001
      %v1746 = vpop.f32.mrf.mxu0
      %v1747 = vadd.f32 0.0, %v1746
      %v1748 = vpop.f32.mrf.mxu0
      %v1749 = vpop.f32.mrf.mxu0
      %v1750 = vadd.f32 0.0, %v1749
      %v1751 = vpop.f32.mrf.mxu0
      %1752 = vmatprep.mubr.bf16.mxu0 0
      %1753 = vmatmul.mubr.bf16.gmra.mxu0 %v1004
      %v1754 = vpop.f32.mrf.mxu0
      %v1755 = vadd.f32 0.0, %v1754
      %v1756 = vpop.f32.mrf.mxu0
      %v1757 = vpop.f32.mrf.mxu0
      %v1758 = vadd.f32 0.0, %v1757
      %v1759 = vpop.f32.mrf.mxu0
      %1760 = vmatprep.mubr.bf16.mxu0 0
      %1761 = vmatmul.mubr.bf16.gmra.mxu0 %v1603
      %v1762 = vpop.f32.mrf.mxu0
      %v1763 = vadd.f32 0.0, %v1762
      %v1764 = vpop.f32.mrf.mxu0
      %v1765 = vpop.f32.mrf.mxu0
      %v1766 = vadd.f32 0.0, %v1765
      %v1767 = vpop.f32.mrf.mxu0
      %1768 = vdwg.mxu0
      %v1769 = vadd.f32 %v1563, %v1643
      %v1770 = vadd.f32 %v1564, %v1646
      %v1771 = vadd.f32 %v1565, %v1651
      %v1772 = vadd.f32 %v1566, %v1654
      %v1773 = vadd.f32 %v1567, %v1659
      %v1774 = vadd.f32 %v1568, %v1662
      %v1775 = vadd.f32 %v1569, %v1667
      %v1776 = vadd.f32 %v1570, %v1670
      %v1777 = vadd.f32 %v1571, %v1675
      %v1778 = vadd.f32 %v1572, %v1678
      %v1779 = vadd.f32 %v1573, %v1683
      %v1780 = vadd.f32 %v1574, %v1686
      %v1781 = vadd.f32 %v1575, %v1691
      %v1782 = vadd.f32 %v1576, %v1694
      %v1783 = vadd.f32 %v1577, %v1699
      %v1784 = vadd.f32 %v1578, %v1702
      %v1785 = vadd.f32 %v1579, %v1707
      %v1786 = vadd.f32 %v1580, %v1710
      %v1787 = vadd.f32 %v1581, %v1715
      %v1788 = vadd.f32 %v1582, %v1718
      %v1789 = vadd.f32 %v1583, %v1723
      %v1790 = vadd.f32 %v1584, %v1726
      %v1791 = vadd.f32 %v1585, %v1731
      %v1792 = vadd.f32 %v1586, %v1734
      %v1793 = vadd.f32 %v1587, %v1739
      %v1794 = vadd.f32 %v1588, %v1742
      %v1795 = vadd.f32 %v1589, %v1747
      %v1796 = vadd.f32 %v1590, %v1750
      %v1797 = vadd.f32 %v1591, %v1755
      %v1798 = vadd.f32 %v1592, %v1758
      %v1799 = vadd.f32 %v1593, %v1763
      %v1800 = vadd.f32 %v1594, %v1766
      %v1802 = vshrl.u32 %v220, 16
      %v1804 = vrot.slane %v1802, 4
      %v1805 = vshll.u32 %v220, 16
      %v1807 = vrot.slane %v1805, 5
      %v1808 = vor.u32 %v1804, %v1807
      %v1809 = vrot.slane %v1808, 4
      %v1811 = vshll.u32 %v221, 16
      %v1813 = vrot.slane %v1811, 5
      %v1814 = vsel %vm229, %v1809, %v1813
      %v1815 = vshrl.u32 %v221, 16
      %v1817 = vrot.slane %v1815, 4
      %v1818 = vor.u32 %v1817, %v1813
      %v1819 = vrot.slane %v1818, 4
      %v1821 = vshll.u32 %v222, 16
      %v1823 = vrot.slane %v1821, 5
      %v1824 = vsel %vm229, %v1819, %v1823
      %s1825 = scalar_lea.vmem %s1, 8
      %v1826 = vld [vmem:[%s1825] sm:$0x3]
      %v1827 = vunpack.c.l.b16 %v1814
      %v1828 = vunpack.c.l.b16 %v1824
      %v1829 = vpack.c.b16 %v1828, %v1827
      %v1831 = vsel %vm664, %v1829, 0
      %v1834 = vsel %vm713, %v1826, 0
      %1836 = vmatprep.subr.bf16.mxu0 0
      %1837 = vmatpush1.bf16.msra.mxu0 0
      %1838 = vmatprep.subr.bf16.mxu0 0
      %1839 = vmatpush1.bf16.msra.mxu0 0
      %1840 = vmatprep.subr.bf16.mxu0 0
      %1841 = vmatpush1.bf16.msra.mxu0 0
      %1842 = vmatprep.subr.bf16.mxu0 0
      %1843 = vmatpush1.bf16.msra.mxu0 0
      %1844 = vmatprep.subr.bf16.mxu0 0
      %1845 = vmatpush1.bf16.msra.mxu0 0
      %1846 = vmatprep.subr.bf16.mxu0 0
      %1847 = vmatpush1.bf16.msra.mxu0 0
      %1848 = vmatprep.subr.bf16.mxu0 0
      %1849 = vmatpush1.bf16.msra.mxu0 0
      %1850 = vmatprep.subr.bf16.mxu0 0
      %1851 = vmatpush1.bf16.msra.mxu0 %v1834
      %1852 = vmatprep.subr.bf16.mxu0 0
      %1853 = vmatpush2.bf16.msra.mxu0 0
      %1854 = vmatprep.subr.bf16.mxu0 0
      %1855 = vmatpush2.bf16.msra.mxu0 0
      %1856 = vmatprep.subr.bf16.mxu0 0
      %1857 = vmatpush2.bf16.msra.mxu0 0
      %1858 = vmatprep.subr.bf16.mxu0 0
      %1859 = vmatpush2.bf16.msra.mxu0 0
      %1860 = vmatprep.subr.bf16.mxu0 0
      %1861 = vmatpush2.bf16.msra.mxu0 0
      %1862 = vmatprep.subr.bf16.mxu0 0
      %1863 = vmatpush2.bf16.msra.mxu0 0
      %1864 = vmatprep.subr.bf16.mxu0 0
      %1865 = vmatpush2.bf16.msra.mxu0 0
      %1866 = vmatprep.subr.bf16.mxu0 0
      %1867 = vmatpush2.bf16.msra.mxu0 0
      %1868 = vmatprep.mubr.bf16.mxu0 0
      %1869 = vmatmul.mubr.bf16.gmra.mxu0 %v669
      %v1870 = vpop.f32.mrf.mxu0
      %v1871 = vadd.f32 0.0, %v1870
      %v1872 = vpop.f32.mrf.mxu0
      %v1873 = vpop.f32.mrf.mxu0
      %v1874 = vadd.f32 0.0, %v1873
      %v1875 = vpop.f32.mrf.mxu0
      %1876 = vmatprep.mubr.bf16.mxu0 0
      %1877 = vmatmul.mubr.bf16.gmra.mxu0 %v672
      %v1878 = vpop.f32.mrf.mxu0
      %v1879 = vadd.f32 0.0, %v1878
      %v1880 = vpop.f32.mrf.mxu0
      %v1881 = vpop.f32.mrf.mxu0
      %v1882 = vadd.f32 0.0, %v1881
      %v1883 = vpop.f32.mrf.mxu0
      %1884 = vmatprep.mubr.bf16.mxu0 0
      %1885 = vmatmul.mubr.bf16.gmra.mxu0 %v675
      %v1886 = vpop.f32.mrf.mxu0
      %v1887 = vadd.f32 0.0, %v1886
      %v1888 = vpop.f32.mrf.mxu0
      %v1889 = vpop.f32.mrf.mxu0
      %v1890 = vadd.f32 0.0, %v1889
      %v1891 = vpop.f32.mrf.mxu0
      %1892 = vmatprep.mubr.bf16.mxu0 0
      %1893 = vmatmul.mubr.bf16.gmra.mxu0 %v678
      %v1894 = vpop.f32.mrf.mxu0
      %v1895 = vadd.f32 0.0, %v1894
      %v1896 = vpop.f32.mrf.mxu0
      %v1897 = vpop.f32.mrf.mxu0
      %v1898 = vadd.f32 0.0, %v1897
      %v1899 = vpop.f32.mrf.mxu0
      %1900 = vmatprep.mubr.bf16.mxu0 0
      %1901 = vmatmul.mubr.bf16.gmra.mxu0 %v681
      %v1902 = vpop.f32.mrf.mxu0
      %v1903 = vadd.f32 0.0, %v1902
      %v1904 = vpop.f32.mrf.mxu0
      %v1905 = vpop.f32.mrf.mxu0
      %v1906 = vadd.f32 0.0, %v1905
      %v1907 = vpop.f32.mrf.mxu0
      %1908 = vmatprep.mubr.bf16.mxu0 0
      %1909 = vmatmul.mubr.bf16.gmra.mxu0 %v684
      %v1910 = vpop.f32.mrf.mxu0
      %v1911 = vadd.f32 0.0, %v1910
      %v1912 = vpop.f32.mrf.mxu0
      %v1913 = vpop.f32.mrf.mxu0
      %v1914 = vadd.f32 0.0, %v1913
      %v1915 = vpop.f32.mrf.mxu0
      %1916 = vmatprep.mubr.bf16.mxu0 0
      %1917 = vmatmul.mubr.bf16.gmra.mxu0 %v687
      %v1918 = vpop.f32.mrf.mxu0
      %v1919 = vadd.f32 0.0, %v1918
      %v1920 = vpop.f32.mrf.mxu0
      %v1921 = vpop.f32.mrf.mxu0
      %v1922 = vadd.f32 0.0, %v1921
      %v1923 = vpop.f32.mrf.mxu0
      %1924 = vmatprep.mubr.bf16.mxu0 0
      %1925 = vmatmul.mubr.bf16.gmra.mxu0 %v690
      %v1926 = vpop.f32.mrf.mxu0
      %v1927 = vadd.f32 0.0, %v1926
      %v1928 = vpop.f32.mrf.mxu0
      %v1929 = vpop.f32.mrf.mxu0
      %v1930 = vadd.f32 0.0, %v1929
      %v1931 = vpop.f32.mrf.mxu0
      %1932 = vmatprep.mubr.bf16.mxu0 0
      %1933 = vmatmul.mubr.bf16.gmra.mxu0 %v693
      %v1934 = vpop.f32.mrf.mxu0
      %v1935 = vadd.f32 0.0, %v1934
      %v1936 = vpop.f32.mrf.mxu0
      %v1937 = vpop.f32.mrf.mxu0
      %v1938 = vadd.f32 0.0, %v1937
      %v1939 = vpop.f32.mrf.mxu0
      %1940 = vmatprep.mubr.bf16.mxu0 0
      %1941 = vmatmul.mubr.bf16.gmra.mxu0 %v696
      %v1942 = vpop.f32.mrf.mxu0
      %v1943 = vadd.f32 0.0, %v1942
      %v1944 = vpop.f32.mrf.mxu0
      %v1945 = vpop.f32.mrf.mxu0
      %v1946 = vadd.f32 0.0, %v1945
      %v1947 = vpop.f32.mrf.mxu0
      %1948 = vmatprep.mubr.bf16.mxu0 0
      %1949 = vmatmul.mubr.bf16.gmra.mxu0 %v699
      %v1950 = vpop.f32.mrf.mxu0
      %v1951 = vadd.f32 0.0, %v1950
      %v1952 = vpop.f32.mrf.mxu0
      %v1953 = vpop.f32.mrf.mxu0
      %v1954 = vadd.f32 0.0, %v1953
      %v1955 = vpop.f32.mrf.mxu0
      %1956 = vmatprep.mubr.bf16.mxu0 0
      %1957 = vmatmul.mubr.bf16.gmra.mxu0 %v702
      %v1958 = vpop.f32.mrf.mxu0
      %v1959 = vadd.f32 0.0, %v1958
      %v1960 = vpop.f32.mrf.mxu0
      %v1961 = vpop.f32.mrf.mxu0
      %v1962 = vadd.f32 0.0, %v1961
      %v1963 = vpop.f32.mrf.mxu0
      %1964 = vmatprep.mubr.bf16.mxu0 0
      %1965 = vmatmul.mubr.bf16.gmra.mxu0 %v705
      %v1966 = vpop.f32.mrf.mxu0
      %v1967 = vadd.f32 0.0, %v1966
      %v1968 = vpop.f32.mrf.mxu0
      %v1969 = vpop.f32.mrf.mxu0
      %v1970 = vadd.f32 0.0, %v1969
      %v1971 = vpop.f32.mrf.mxu0
      %1972 = vmatprep.mubr.bf16.mxu0 0
      %1973 = vmatmul.mubr.bf16.gmra.mxu0 %v708
      %v1974 = vpop.f32.mrf.mxu0
      %v1975 = vadd.f32 0.0, %v1974
      %v1976 = vpop.f32.mrf.mxu0
      %v1977 = vpop.f32.mrf.mxu0
      %v1978 = vadd.f32 0.0, %v1977
      %v1979 = vpop.f32.mrf.mxu0
      %1980 = vmatprep.mubr.bf16.mxu0 0
      %1981 = vmatmul.mubr.bf16.gmra.mxu0 %v711
      %v1982 = vpop.f32.mrf.mxu0
      %v1983 = vadd.f32 0.0, %v1982
      %v1984 = vpop.f32.mrf.mxu0
      %v1985 = vpop.f32.mrf.mxu0
      %v1986 = vadd.f32 0.0, %v1985
      %v1987 = vpop.f32.mrf.mxu0
      %1988 = vmatprep.mubr.bf16.mxu0 0
      %1989 = vmatmul.mubr.bf16.gmra.mxu0 %v1831
      %v1990 = vpop.f32.mrf.mxu0
      %v1991 = vadd.f32 0.0, %v1990
      %v1992 = vpop.f32.mrf.mxu0
      %v1993 = vpop.f32.mrf.mxu0
      %v1994 = vadd.f32 0.0, %v1993
      %v1995 = vpop.f32.mrf.mxu0
      %1996 = vdwg.mxu0
      %v1997 = vadd.f32 %v1769, %v1871
      %v1998 = vadd.f32 %v1770, %v1874
      %v1999 = vadd.f32 %v1771, %v1879
      %v2000 = vadd.f32 %v1772, %v1882
      %v2001 = vadd.f32 %v1773, %v1887
      %v2002 = vadd.f32 %v1774, %v1890
      %v2003 = vadd.f32 %v1775, %v1895
      %v2004 = vadd.f32 %v1776, %v1898
      %v2005 = vadd.f32 %v1777, %v1903
      %v2006 = vadd.f32 %v1778, %v1906
      %v2007 = vadd.f32 %v1779, %v1911
      %v2008 = vadd.f32 %v1780, %v1914
      %v2009 = vadd.f32 %v1781, %v1919
      %v2010 = vadd.f32 %v1782, %v1922
      %v2011 = vadd.f32 %v1783, %v1927
      %v2012 = vadd.f32 %v1784, %v1930
      %v2013 = vadd.f32 %v1785, %v1935
      %v2014 = vadd.f32 %v1786, %v1938
      %v2015 = vadd.f32 %v1787, %v1943
      %v2016 = vadd.f32 %v1788, %v1946
      %v2017 = vadd.f32 %v1789, %v1951
      %v2018 = vadd.f32 %v1790, %v1954
      %v2019 = vadd.f32 %v1791, %v1959
      %v2020 = vadd.f32 %v1792, %v1962
      %v2021 = vadd.f32 %v1793, %v1967
      %v2022 = vadd.f32 %v1794, %v1970
      %v2023 = vadd.f32 %v1795, %v1975
      %v2024 = vadd.f32 %v1796, %v1978
      %v2025 = vadd.f32 %v1797, %v1983
      %v2026 = vadd.f32 %v1798, %v1986
      %v2027 = vadd.f32 %v1799, %v1991
      %v2028 = vadd.f32 %v1800, %v1994
      %v2030 = vrot.slane %v220, 5
      %v2031 = vrot.slane %v2030, 4
      %v2032 = vrot.slane %v221, 5
      %v2033 = vsel %vm1188, %v2031, %v2032
      %v2034 = vrot.slane %v2032, 4
      %v2035 = vrot.slane %v222, 5
      %v2036 = vsel %vm1188, %v2034, %v2035
      %s2037 = scalar_lea.vmem %s1, 10
      %v2038 = vld [vmem:[%s2037] sm:$0x3]
      %v2039 = vunpack.c.l.b16 %v2033
      %v2040 = vunpack.c.l.b16 %v2036
      %v2041 = vpack.c.b16 %v2040, %v2039
      %v2043 = vsel %vm664, %v2041, 0
      %v2046 = vsel %vm713, %v2038, 0
      %2048 = vmatprep.subr.bf16.mxu0 0
      %2049 = vmatpush1.bf16.msra.mxu0 0
      %2050 = vmatprep.subr.bf16.mxu0 0
      %2051 = vmatpush1.bf16.msra.mxu0 0
      %2052 = vmatprep.subr.bf16.mxu0 0
      %2053 = vmatpush1.bf16.msra.mxu0 0
      %2054 = vmatprep.subr.bf16.mxu0 0
      %2055 = vmatpush1.bf16.msra.mxu0 0
      %2056 = vmatprep.subr.bf16.mxu0 0
      %2057 = vmatpush1.bf16.msra.mxu0 0
      %2058 = vmatprep.subr.bf16.mxu0 0
      %2059 = vmatpush1.bf16.msra.mxu0 0
      %2060 = vmatprep.subr.bf16.mxu0 0
      %2061 = vmatpush1.bf16.msra.mxu0 0
      %2062 = vmatprep.subr.bf16.mxu0 0
      %2063 = vmatpush1.bf16.msra.mxu0 %v2046
      %2064 = vmatprep.subr.bf16.mxu0 0
      %2065 = vmatpush2.bf16.msra.mxu0 0
      %2066 = vmatprep.subr.bf16.mxu0 0
      %2067 = vmatpush2.bf16.msra.mxu0 0
      %2068 = vmatprep.subr.bf16.mxu0 0
      %2069 = vmatpush2.bf16.msra.mxu0 0
      %2070 = vmatprep.subr.bf16.mxu0 0
      %2071 = vmatpush2.bf16.msra.mxu0 0
      %2072 = vmatprep.subr.bf16.mxu0 0
      %2073 = vmatpush2.bf16.msra.mxu0 0
      %2074 = vmatprep.subr.bf16.mxu0 0
      %2075 = vmatpush2.bf16.msra.mxu0 0
      %2076 = vmatprep.subr.bf16.mxu0 0
      %2077 = vmatpush2.bf16.msra.mxu0 0
      %2078 = vmatprep.subr.bf16.mxu0 0
      %2079 = vmatpush2.bf16.msra.mxu0 0
      %2080 = vmatprep.mubr.bf16.mxu0 0
      %2081 = vmatmul.mubr.bf16.gmra.mxu0 %v1355
      %v2082 = vpop.f32.mrf.mxu0
      %v2083 = vadd.f32 0.0, %v2082
      %v2084 = vpop.f32.mrf.mxu0
      %v2085 = vpop.f32.mrf.mxu0
      %v2086 = vadd.f32 0.0, %v2085
      %v2087 = vpop.f32.mrf.mxu0
      %2088 = vmatprep.mubr.bf16.mxu0 0
      %2089 = vmatmul.mubr.bf16.gmra.mxu0 %v1358
      %v2090 = vpop.f32.mrf.mxu0
      %v2091 = vadd.f32 0.0, %v2090
      %v2092 = vpop.f32.mrf.mxu0
      %v2093 = vpop.f32.mrf.mxu0
      %v2094 = vadd.f32 0.0, %v2093
      %v2095 = vpop.f32.mrf.mxu0
      %2096 = vmatprep.mubr.bf16.mxu0 0
      %2097 = vmatmul.mubr.bf16.gmra.mxu0 %v1361
      %v2098 = vpop.f32.mrf.mxu0
      %v2099 = vadd.f32 0.0, %v2098
      %v2100 = vpop.f32.mrf.mxu0
      %v2101 = vpop.f32.mrf.mxu0
      %v2102 = vadd.f32 0.0, %v2101
      %v2103 = vpop.f32.mrf.mxu0
      %2104 = vmatprep.mubr.bf16.mxu0 0
      %2105 = vmatmul.mubr.bf16.gmra.mxu0 %v1364
      %v2106 = vpop.f32.mrf.mxu0
      %v2107 = vadd.f32 0.0, %v2106
      %v2108 = vpop.f32.mrf.mxu0
      %v2109 = vpop.f32.mrf.mxu0
      %v2110 = vadd.f32 0.0, %v2109
      %v2111 = vpop.f32.mrf.mxu0
      %2112 = vmatprep.mubr.bf16.mxu0 0
      %2113 = vmatmul.mubr.bf16.gmra.mxu0 %v1367
      %v2114 = vpop.f32.mrf.mxu0
      %v2115 = vadd.f32 0.0, %v2114
      %v2116 = vpop.f32.mrf.mxu0
      %v2117 = vpop.f32.mrf.mxu0
      %v2118 = vadd.f32 0.0, %v2117
      %v2119 = vpop.f32.mrf.mxu0
      %2120 = vmatprep.mubr.bf16.mxu0 0
      %2121 = vmatmul.mubr.bf16.gmra.mxu0 %v1370
      %v2122 = vpop.f32.mrf.mxu0
      %v2123 = vadd.f32 0.0, %v2122
      %v2124 = vpop.f32.mrf.mxu0
      %v2125 = vpop.f32.mrf.mxu0
      %v2126 = vadd.f32 0.0, %v2125
      %v2127 = vpop.f32.mrf.mxu0
      %2128 = vmatprep.mubr.bf16.mxu0 0
      %2129 = vmatmul.mubr.bf16.gmra.mxu0 %v1373
      %v2130 = vpop.f32.mrf.mxu0
      %v2131 = vadd.f32 0.0, %v2130
      %v2132 = vpop.f32.mrf.mxu0
      %v2133 = vpop.f32.mrf.mxu0
      %v2134 = vadd.f32 0.0, %v2133
      %v2135 = vpop.f32.mrf.mxu0
      %2136 = vmatprep.mubr.bf16.mxu0 0
      %2137 = vmatmul.mubr.bf16.gmra.mxu0 %v1376
      %v2138 = vpop.f32.mrf.mxu0
      %v2139 = vadd.f32 0.0, %v2138
      %v2140 = vpop.f32.mrf.mxu0
      %v2141 = vpop.f32.mrf.mxu0
      %v2142 = vadd.f32 0.0, %v2141
      %v2143 = vpop.f32.mrf.mxu0
      %2144 = vmatprep.mubr.bf16.mxu0 0
      %2145 = vmatmul.mubr.bf16.gmra.mxu0 %v1379
      %v2146 = vpop.f32.mrf.mxu0
      %v2147 = vadd.f32 0.0, %v2146
      %v2148 = vpop.f32.mrf.mxu0
      %v2149 = vpop.f32.mrf.mxu0
      %v2150 = vadd.f32 0.0, %v2149
      %v2151 = vpop.f32.mrf.mxu0
      %2152 = vmatprep.mubr.bf16.mxu0 0
      %2153 = vmatmul.mubr.bf16.gmra.mxu0 %v1382
      %v2154 = vpop.f32.mrf.mxu0
      %v2155 = vadd.f32 0.0, %v2154
      %v2156 = vpop.f32.mrf.mxu0
      %v2157 = vpop.f32.mrf.mxu0
      %v2158 = vadd.f32 0.0, %v2157
      %v2159 = vpop.f32.mrf.mxu0
      %2160 = vmatprep.mubr.bf16.mxu0 0
      %2161 = vmatmul.mubr.bf16.gmra.mxu0 %v1385
      %v2162 = vpop.f32.mrf.mxu0
      %v2163 = vadd.f32 0.0, %v2162
      %v2164 = vpop.f32.mrf.mxu0
      %v2165 = vpop.f32.mrf.mxu0
      %v2166 = vadd.f32 0.0, %v2165
      %v2167 = vpop.f32.mrf.mxu0
      %2168 = vmatprep.mubr.bf16.mxu0 0
      %2169 = vmatmul.mubr.bf16.gmra.mxu0 %v1388
      %v2170 = vpop.f32.mrf.mxu0
      %v2171 = vadd.f32 0.0, %v2170
      %v2172 = vpop.f32.mrf.mxu0
      %v2173 = vpop.f32.mrf.mxu0
      %v2174 = vadd.f32 0.0, %v2173
      %v2175 = vpop.f32.mrf.mxu0
      %2176 = vmatprep.mubr.bf16.mxu0 0
      %2177 = vmatmul.mubr.bf16.gmra.mxu0 %v1391
      %v2178 = vpop.f32.mrf.mxu0
      %v2179 = vadd.f32 0.0, %v2178
      %v2180 = vpop.f32.mrf.mxu0
      %v2181 = vpop.f32.mrf.mxu0
      %v2182 = vadd.f32 0.0, %v2181
      %v2183 = vpop.f32.mrf.mxu0
      %2184 = vmatprep.mubr.bf16.mxu0 0
      %2185 = vmatmul.mubr.bf16.gmra.mxu0 %v1394
      %v2186 = vpop.f32.mrf.mxu0
      %v2187 = vadd.f32 0.0, %v2186
      %v2188 = vpop.f32.mrf.mxu0
      %v2189 = vpop.f32.mrf.mxu0
      %v2190 = vadd.f32 0.0, %v2189
      %v2191 = vpop.f32.mrf.mxu0
      %2192 = vmatprep.mubr.bf16.mxu0 0
      %2193 = vmatmul.mubr.bf16.gmra.mxu0 %v1397
      %v2194 = vpop.f32.mrf.mxu0
      %v2195 = vadd.f32 0.0, %v2194
      %v2196 = vpop.f32.mrf.mxu0
      %v2197 = vpop.f32.mrf.mxu0
      %v2198 = vadd.f32 0.0, %v2197
      %v2199 = vpop.f32.mrf.mxu0
      %2200 = vmatprep.mubr.bf16.mxu0 0
      %2201 = vmatmul.mubr.bf16.gmra.mxu0 %v2043
      %v2202 = vpop.f32.mrf.mxu0
      %v2203 = vadd.f32 0.0, %v2202
      %v2204 = vpop.f32.mrf.mxu0
      %v2205 = vpop.f32.mrf.mxu0
      %v2206 = vadd.f32 0.0, %v2205
      %v2207 = vpop.f32.mrf.mxu0
      %2208 = vdwg.mxu0
      %v2209 = vadd.f32 %v1997, %v2083
      %v2210 = vadd.f32 %v1998, %v2086
      %v2211 = vadd.f32 %v1999, %v2091
      %v2212 = vadd.f32 %v2000, %v2094
      %v2213 = vadd.f32 %v2001, %v2099
      %v2214 = vadd.f32 %v2002, %v2102
      %v2215 = vadd.f32 %v2003, %v2107
      %v2216 = vadd.f32 %v2004, %v2110
      %v2217 = vadd.f32 %v2005, %v2115
      %v2218 = vadd.f32 %v2006, %v2118
      %v2219 = vadd.f32 %v2007, %v2123
      %v2220 = vadd.f32 %v2008, %v2126
      %v2221 = vadd.f32 %v2009, %v2131
      %v2222 = vadd.f32 %v2010, %v2134
      %v2223 = vadd.f32 %v2011, %v2139
      %v2224 = vadd.f32 %v2012, %v2142
      %v2225 = vadd.f32 %v2013, %v2147
      %v2226 = vadd.f32 %v2014, %v2150
      %v2227 = vadd.f32 %v2015, %v2155
      %v2228 = vadd.f32 %v2016, %v2158
      %v2229 = vadd.f32 %v2017, %v2163
      %v2230 = vadd.f32 %v2018, %v2166
      %v2231 = vadd.f32 %v2019, %v2171
      %v2232 = vadd.f32 %v2020, %v2174
      %v2233 = vadd.f32 %v2021, %v2179
      %v2234 = vadd.f32 %v2022, %v2182
      %v2235 = vadd.f32 %v2023, %v2187
      %v2236 = vadd.f32 %v2024, %v2190
      %v2237 = vadd.f32 %v2025, %v2195
      %v2238 = vadd.f32 %v2026, %v2198
      %v2239 = vadd.f32 %v2027, %v2203
      %v2240 = vadd.f32 %v2028, %v2206
      %s2241 = scalar_lea.vmem %s1, 12
      %v2242 = vld [vmem:[%s2241] sm:$0x3]
      %v2245 = vunpack.c.l.b16 %v223
      %v2246 = vunpack.c.l.b16 %v224
      %v2247 = vpack.c.b16 %v2246, %v2245
      %v2249 = vsel %vm664, %v2247, 0
      %v2252 = vsel %vm713, %v2242, 0
      %2254 = vmatprep.subr.bf16.mxu0 0
      %2255 = vmatpush1.bf16.msra.mxu0 0
      %2256 = vmatprep.subr.bf16.mxu0 0
      %2257 = vmatpush1.bf16.msra.mxu0 0
      %2258 = vmatprep.subr.bf16.mxu0 0
      %2259 = vmatpush1.bf16.msra.mxu0 0
      %2260 = vmatprep.subr.bf16.mxu0 0
      %2261 = vmatpush1.bf16.msra.mxu0 0
      %2262 = vmatprep.subr.bf16.mxu0 0
      %2263 = vmatpush1.bf16.msra.mxu0 0
      %2264 = vmatprep.subr.bf16.mxu0 0
      %2265 = vmatpush1.bf16.msra.mxu0 0
      %2266 = vmatprep.subr.bf16.mxu0 0
      %2267 = vmatpush1.bf16.msra.mxu0 0
      %2268 = vmatprep.subr.bf16.mxu0 0
      %2269 = vmatpush1.bf16.msra.mxu0 %v2252
      %2270 = vmatprep.subr.bf16.mxu0 0
      %2271 = vmatpush2.bf16.msra.mxu0 0
      %2272 = vmatprep.subr.bf16.mxu0 0
      %2273 = vmatpush2.bf16.msra.mxu0 0
      %2274 = vmatprep.subr.bf16.mxu0 0
      %2275 = vmatpush2.bf16.msra.mxu0 0
      %2276 = vmatprep.subr.bf16.mxu0 0
      %2277 = vmatpush2.bf16.msra.mxu0 0
      %2278 = vmatprep.subr.bf16.mxu0 0
      %2279 = vmatpush2.bf16.msra.mxu0 0
      %2280 = vmatprep.subr.bf16.mxu0 0
      %2281 = vmatpush2.bf16.msra.mxu0 0
      %2282 = vmatprep.subr.bf16.mxu0 0
      %2283 = vmatpush2.bf16.msra.mxu0 0
      %2284 = vmatprep.subr.bf16.mxu0 0
      %2285 = vmatpush2.bf16.msra.mxu0 0
      %2286 = vmatprep.mubr.bf16.mxu0 0
      %2287 = vmatmul.mubr.bf16.gmra.mxu0 %v965
      %v2288 = vpop.f32.mrf.mxu0
      %v2289 = vadd.f32 0.0, %v2288
      %v2290 = vpop.f32.mrf.mxu0
      %v2291 = vpop.f32.mrf.mxu0
      %v2292 = vadd.f32 0.0, %v2291
      %v2293 = vpop.f32.mrf.mxu0
      %2294 = vmatprep.mubr.bf16.mxu0 0
      %2295 = vmatmul.mubr.bf16.gmra.mxu0 %v968
      %v2296 = vpop.f32.mrf.mxu0
      %v2297 = vadd.f32 0.0, %v2296
      %v2298 = vpop.f32.mrf.mxu0
      %v2299 = vpop.f32.mrf.mxu0
      %v2300 = vadd.f32 0.0, %v2299
      %v2301 = vpop.f32.mrf.mxu0
      %2302 = vmatprep.mubr.bf16.mxu0 0
      %2303 = vmatmul.mubr.bf16.gmra.mxu0 %v971
      %v2304 = vpop.f32.mrf.mxu0
      %v2305 = vadd.f32 0.0, %v2304
      %v2306 = vpop.f32.mrf.mxu0
      %v2307 = vpop.f32.mrf.mxu0
      %v2308 = vadd.f32 0.0, %v2307
      %v2309 = vpop.f32.mrf.mxu0
      %2310 = vmatprep.mubr.bf16.mxu0 0
      %2311 = vmatmul.mubr.bf16.gmra.mxu0 %v974
      %v2312 = vpop.f32.mrf.mxu0
      %v2313 = vadd.f32 0.0, %v2312
      %v2314 = vpop.f32.mrf.mxu0
      %v2315 = vpop.f32.mrf.mxu0
      %v2316 = vadd.f32 0.0, %v2315
      %v2317 = vpop.f32.mrf.mxu0
      %2318 = vmatprep.mubr.bf16.mxu0 0
      %2319 = vmatmul.mubr.bf16.gmra.mxu0 %v977
      %v2320 = vpop.f32.mrf.mxu0
      %v2321 = vadd.f32 0.0, %v2320
      %v2322 = vpop.f32.mrf.mxu0
      %v2323 = vpop.f32.mrf.mxu0
      %v2324 = vadd.f32 0.0, %v2323
      %v2325 = vpop.f32.mrf.mxu0
      %2326 = vmatprep.mubr.bf16.mxu0 0
      %2327 = vmatmul.mubr.bf16.gmra.mxu0 %v980
      %v2328 = vpop.f32.mrf.mxu0
      %v2329 = vadd.f32 0.0, %v2328
      %v2330 = vpop.f32.mrf.mxu0
      %v2331 = vpop.f32.mrf.mxu0
      %v2332 = vadd.f32 0.0, %v2331
      %v2333 = vpop.f32.mrf.mxu0
      %2334 = vmatprep.mubr.bf16.mxu0 0
      %2335 = vmatmul.mubr.bf16.gmra.mxu0 %v983
      %v2336 = vpop.f32.mrf.mxu0
      %v2337 = vadd.f32 0.0, %v2336
      %v2338 = vpop.f32.mrf.mxu0
      %v2339 = vpop.f32.mrf.mxu0
      %v2340 = vadd.f32 0.0, %v2339
      %v2341 = vpop.f32.mrf.mxu0
      %2342 = vmatprep.mubr.bf16.mxu0 0
      %2343 = vmatmul.mubr.bf16.gmra.mxu0 %v986
      %v2344 = vpop.f32.mrf.mxu0
      %v2345 = vadd.f32 0.0, %v2344
      %v2346 = vpop.f32.mrf.mxu0
      %v2347 = vpop.f32.mrf.mxu0
      %v2348 = vadd.f32 0.0, %v2347
      %v2349 = vpop.f32.mrf.mxu0
      %2350 = vmatprep.mubr.bf16.mxu0 0
      %2351 = vmatmul.mubr.bf16.gmra.mxu0 %v989
      %v2352 = vpop.f32.mrf.mxu0
      %v2353 = vadd.f32 0.0, %v2352
      %v2354 = vpop.f32.mrf.mxu0
      %v2355 = vpop.f32.mrf.mxu0
      %v2356 = vadd.f32 0.0, %v2355
      %v2357 = vpop.f32.mrf.mxu0
      %2358 = vmatprep.mubr.bf16.mxu0 0
      %2359 = vmatmul.mubr.bf16.gmra.mxu0 %v992
      %v2360 = vpop.f32.mrf.mxu0
      %v2361 = vadd.f32 0.0, %v2360
      %v2362 = vpop.f32.mrf.mxu0
      %v2363 = vpop.f32.mrf.mxu0
      %v2364 = vadd.f32 0.0, %v2363
      %v2365 = vpop.f32.mrf.mxu0
      %2366 = vmatprep.mubr.bf16.mxu0 0
      %2367 = vmatmul.mubr.bf16.gmra.mxu0 %v995
      %v2368 = vpop.f32.mrf.mxu0
      %v2369 = vadd.f32 0.0, %v2368
      %v2370 = vpop.f32.mrf.mxu0
      %v2371 = vpop.f32.mrf.mxu0
      %v2372 = vadd.f32 0.0, %v2371
      %v2373 = vpop.f32.mrf.mxu0
      %2374 = vmatprep.mubr.bf16.mxu0 0
      %2375 = vmatmul.mubr.bf16.gmra.mxu0 %v998
      %v2376 = vpop.f32.mrf.mxu0
      %v2377 = vadd.f32 0.0, %v2376
      %v2378 = vpop.f32.mrf.mxu0
      %v2379 = vpop.f32.mrf.mxu0
      %v2380 = vadd.f32 0.0, %v2379
      %v2381 = vpop.f32.mrf.mxu0
      %2382 = vmatprep.mubr.bf16.mxu0 0
      %2383 = vmatmul.mubr.bf16.gmra.mxu0 %v1001
      %v2384 = vpop.f32.mrf.mxu0
      %v2385 = vadd.f32 0.0, %v2384
      %v2386 = vpop.f32.mrf.mxu0
      %v2387 = vpop.f32.mrf.mxu0
      %v2388 = vadd.f32 0.0, %v2387
      %v2389 = vpop.f32.mrf.mxu0
      %2390 = vmatprep.mubr.bf16.mxu0 0
      %2391 = vmatmul.mubr.bf16.gmra.mxu0 %v1004
      %v2392 = vpop.f32.mrf.mxu0
      %v2393 = vadd.f32 0.0, %v2392
      %v2394 = vpop.f32.mrf.mxu0
      %v2395 = vpop.f32.mrf.mxu0
      %v2396 = vadd.f32 0.0, %v2395
      %v2397 = vpop.f32.mrf.mxu0
      %2398 = vmatprep.mubr.bf16.mxu0 0
      %2399 = vmatmul.mubr.bf16.gmra.mxu0 %v1603
      %v2400 = vpop.f32.mrf.mxu0
      %v2401 = vadd.f32 0.0, %v2400
      %v2402 = vpop.f32.mrf.mxu0
      %v2403 = vpop.f32.mrf.mxu0
      %v2404 = vadd.f32 0.0, %v2403
      %v2405 = vpop.f32.mrf.mxu0
      %2406 = vmatprep.mubr.bf16.mxu0 0
      %2407 = vmatmul.mubr.bf16.gmra.mxu0 %v2249
      %v2408 = vpop.f32.mrf.mxu0
      %v2409 = vadd.f32 0.0, %v2408
      %v2410 = vpop.f32.mrf.mxu0
      %v2411 = vpop.f32.mrf.mxu0
      %v2412 = vadd.f32 0.0, %v2411
      %v2413 = vpop.f32.mrf.mxu0
      %2414 = vdwg.mxu0
      %v2415 = vadd.f32 %v2209, %v2289
      %v2416 = vadd.f32 %v2210, %v2292
      %v2417 = vadd.f32 %v2211, %v2297
      %v2418 = vadd.f32 %v2212, %v2300
      %v2419 = vadd.f32 %v2213, %v2305
      %v2420 = vadd.f32 %v2214, %v2308
      %v2421 = vadd.f32 %v2215, %v2313
      %v2422 = vadd.f32 %v2216, %v2316
      %v2423 = vadd.f32 %v2217, %v2321
      %v2424 = vadd.f32 %v2218, %v2324
      %v2425 = vadd.f32 %v2219, %v2329
      %v2426 = vadd.f32 %v2220, %v2332
      %v2427 = vadd.f32 %v2221, %v2337
      %v2428 = vadd.f32 %v2222, %v2340
      %v2429 = vadd.f32 %v2223, %v2345
      %v2430 = vadd.f32 %v2224, %v2348
      %v2431 = vadd.f32 %v2225, %v2353
      %v2432 = vadd.f32 %v2226, %v2356
      %v2433 = vadd.f32 %v2227, %v2361
      %v2434 = vadd.f32 %v2228, %v2364
      %v2435 = vadd.f32 %v2229, %v2369
      %v2436 = vadd.f32 %v2230, %v2372
      %v2437 = vadd.f32 %v2231, %v2377
      %v2438 = vadd.f32 %v2232, %v2380
      %v2439 = vadd.f32 %v2233, %v2385
      %v2440 = vadd.f32 %v2234, %v2388
      %v2441 = vadd.f32 %v2235, %v2393
      %v2442 = vadd.f32 %v2236, %v2396
      %v2443 = vadd.f32 %v2237, %v2401
      %v2444 = vadd.f32 %v2238, %v2404
      %v2445 = vadd.f32 %v2239, %v2409
      %v2446 = vadd.f32 %v2240, %v2412
      %v2448 = vshrl.u32 %v223, 16
      %v2450 = vrot.slane %v2448, 4
      %v2451 = vshll.u32 %v223, 16
      %v2453 = vrot.slane %v2451, 5
      %v2454 = vor.u32 %v2450, %v2453
      %v2455 = vrot.slane %v2454, 4
      %v2457 = vshll.u32 %v224, 16
      %v2459 = vrot.slane %v2457, 5
      %v2460 = vsel %vm229, %v2455, %v2459
      %v2461 = vshrl.u32 %v224, 16
      %v2463 = vrot.slane %v2461, 4
      %v2464 = vor.u32 %v2463, %v2459
      %v2465 = vrot.slane %v2464, 4
      %v2467 = vshll.u32 %v225, 16
      %v2469 = vrot.slane %v2467, 5
      %v2470 = vsel %vm229, %v2465, %v2469
      %s2471 = scalar_lea.vmem %s1, 14
      %v2472 = vld [vmem:[%s2471] sm:$0x3]
      %v2473 = vunpack.c.l.b16 %v2460
      %v2474 = vunpack.c.l.b16 %v2470
      %v2475 = vpack.c.b16 %v2474, %v2473
      %v2477 = vsel %vm664, %v2475, 0
      %v2480 = vsel %vm713, %v2472, 0
      %2482 = vmatprep.subr.bf16.mxu0 0
      %2483 = vmatpush1.bf16.msra.mxu0 0
      %2484 = vmatprep.subr.bf16.mxu0 0
      %2485 = vmatpush1.bf16.msra.mxu0 0
      %2486 = vmatprep.subr.bf16.mxu0 0
      %2487 = vmatpush1.bf16.msra.mxu0 0
      %2488 = vmatprep.subr.bf16.mxu0 0
      %2489 = vmatpush1.bf16.msra.mxu0 0
      %2490 = vmatprep.subr.bf16.mxu0 0
      %2491 = vmatpush1.bf16.msra.mxu0 0
      %2492 = vmatprep.subr.bf16.mxu0 0
      %2493 = vmatpush1.bf16.msra.mxu0 0
      %2494 = vmatprep.subr.bf16.mxu0 0
      %2495 = vmatpush1.bf16.msra.mxu0 0
      %2496 = vmatprep.subr.bf16.mxu0 0
      %2497 = vmatpush1.bf16.msra.mxu0 %v2480
      %2498 = vmatprep.subr.bf16.mxu0 0
      %2499 = vmatpush2.bf16.msra.mxu0 0
      %2500 = vmatprep.subr.bf16.mxu0 0
      %2501 = vmatpush2.bf16.msra.mxu0 0
      %2502 = vmatprep.subr.bf16.mxu0 0
      %2503 = vmatpush2.bf16.msra.mxu0 0
      %2504 = vmatprep.subr.bf16.mxu0 0
      %2505 = vmatpush2.bf16.msra.mxu0 0
      %2506 = vmatprep.subr.bf16.mxu0 0
      %2507 = vmatpush2.bf16.msra.mxu0 0
      %2508 = vmatprep.subr.bf16.mxu0 0
      %2509 = vmatpush2.bf16.msra.mxu0 0
      %2510 = vmatprep.subr.bf16.mxu0 0
      %2511 = vmatpush2.bf16.msra.mxu0 0
      %2512 = vmatprep.subr.bf16.mxu0 0
      %2513 = vmatpush2.bf16.msra.mxu0 0
      %2514 = vmatprep.mubr.bf16.mxu0 0
      %2515 = vmatmul.mubr.bf16.gmra.mxu0 %v672
      %v2516 = vpop.f32.mrf.mxu0
      %v2517 = vadd.f32 0.0, %v2516
      %v2518 = vpop.f32.mrf.mxu0
      %v2519 = vpop.f32.mrf.mxu0
      %v2520 = vadd.f32 0.0, %v2519
      %v2521 = vpop.f32.mrf.mxu0
      %2522 = vmatprep.mubr.bf16.mxu0 0
      %2523 = vmatmul.mubr.bf16.gmra.mxu0 %v675
      %v2524 = vpop.f32.mrf.mxu0
      %v2525 = vadd.f32 0.0, %v2524
      %v2526 = vpop.f32.mrf.mxu0
      %v2527 = vpop.f32.mrf.mxu0
      %v2528 = vadd.f32 0.0, %v2527
      %v2529 = vpop.f32.mrf.mxu0
      %2530 = vmatprep.mubr.bf16.mxu0 0
      %2531 = vmatmul.mubr.bf16.gmra.mxu0 %v678
      %v2532 = vpop.f32.mrf.mxu0
      %v2533 = vadd.f32 0.0, %v2532
      %v2534 = vpop.f32.mrf.mxu0
      %v2535 = vpop.f32.mrf.mxu0
      %v2536 = vadd.f32 0.0, %v2535
      %v2537 = vpop.f32.mrf.mxu0
      %2538 = vmatprep.mubr.bf16.mxu0 0
      %2539 = vmatmul.mubr.bf16.gmra.mxu0 %v681
      %v2540 = vpop.f32.mrf.mxu0
      %v2541 = vadd.f32 0.0, %v2540
      %v2542 = vpop.f32.mrf.mxu0
      %v2543 = vpop.f32.mrf.mxu0
      %v2544 = vadd.f32 0.0, %v2543
      %v2545 = vpop.f32.mrf.mxu0
      %2546 = vmatprep.mubr.bf16.mxu0 0
      %2547 = vmatmul.mubr.bf16.gmra.mxu0 %v684
      %v2548 = vpop.f32.mrf.mxu0
      %v2549 = vadd.f32 0.0, %v2548
      %v2550 = vpop.f32.mrf.mxu0
      %v2551 = vpop.f32.mrf.mxu0
      %v2552 = vadd.f32 0.0, %v2551
      %v2553 = vpop.f32.mrf.mxu0
      %2554 = vmatprep.mubr.bf16.mxu0 0
      %2555 = vmatmul.mubr.bf16.gmra.mxu0 %v687
      %v2556 = vpop.f32.mrf.mxu0
      %v2557 = vadd.f32 0.0, %v2556
      %v2558 = vpop.f32.mrf.mxu0
      %v2559 = vpop.f32.mrf.mxu0
      %v2560 = vadd.f32 0.0, %v2559
      %v2561 = vpop.f32.mrf.mxu0
      %2562 = vmatprep.mubr.bf16.mxu0 0
      %2563 = vmatmul.mubr.bf16.gmra.mxu0 %v690
      %v2564 = vpop.f32.mrf.mxu0
      %v2565 = vadd.f32 0.0, %v2564
      %v2566 = vpop.f32.mrf.mxu0
      %v2567 = vpop.f32.mrf.mxu0
      %v2568 = vadd.f32 0.0, %v2567
      %v2569 = vpop.f32.mrf.mxu0
      %2570 = vmatprep.mubr.bf16.mxu0 0
      %2571 = vmatmul.mubr.bf16.gmra.mxu0 %v693
      %v2572 = vpop.f32.mrf.mxu0
      %v2573 = vadd.f32 0.0, %v2572
      %v2574 = vpop.f32.mrf.mxu0
      %v2575 = vpop.f32.mrf.mxu0
      %v2576 = vadd.f32 0.0, %v2575
      %v2577 = vpop.f32.mrf.mxu0
      %2578 = vmatprep.mubr.bf16.mxu0 0
      %2579 = vmatmul.mubr.bf16.gmra.mxu0 %v696
      %v2580 = vpop.f32.mrf.mxu0
      %v2581 = vadd.f32 0.0, %v2580
      %v2582 = vpop.f32.mrf.mxu0
      %v2583 = vpop.f32.mrf.mxu0
      %v2584 = vadd.f32 0.0, %v2583
      %v2585 = vpop.f32.mrf.mxu0
      %2586 = vmatprep.mubr.bf16.mxu0 0
      %2587 = vmatmul.mubr.bf16.gmra.mxu0 %v699
      %v2588 = vpop.f32.mrf.mxu0
      %v2589 = vadd.f32 0.0, %v2588
      %v2590 = vpop.f32.mrf.mxu0
      %v2591 = vpop.f32.mrf.mxu0
      %v2592 = vadd.f32 0.0, %v2591
      %v2593 = vpop.f32.mrf.mxu0
      %2594 = vmatprep.mubr.bf16.mxu0 0
      %2595 = vmatmul.mubr.bf16.gmra.mxu0 %v702
      %v2596 = vpop.f32.mrf.mxu0
      %v2597 = vadd.f32 0.0, %v2596
      %v2598 = vpop.f32.mrf.mxu0
      %v2599 = vpop.f32.mrf.mxu0
      %v2600 = vadd.f32 0.0, %v2599
      %v2601 = vpop.f32.mrf.mxu0
      %2602 = vmatprep.mubr.bf16.mxu0 0
      %2603 = vmatmul.mubr.bf16.gmra.mxu0 %v705
      %v2604 = vpop.f32.mrf.mxu0
      %v2605 = vadd.f32 0.0, %v2604
      %v2606 = vpop.f32.mrf.mxu0
      %v2607 = vpop.f32.mrf.mxu0
      %v2608 = vadd.f32 0.0, %v2607
      %v2609 = vpop.f32.mrf.mxu0
      %2610 = vmatprep.mubr.bf16.mxu0 0
      %2611 = vmatmul.mubr.bf16.gmra.mxu0 %v708
      %v2612 = vpop.f32.mrf.mxu0
      %v2613 = vadd.f32 0.0, %v2612
      %v2614 = vpop.f32.mrf.mxu0
      %v2615 = vpop.f32.mrf.mxu0
      %v2616 = vadd.f32 0.0, %v2615
      %v2617 = vpop.f32.mrf.mxu0
      %2618 = vmatprep.mubr.bf16.mxu0 0
      %2619 = vmatmul.mubr.bf16.gmra.mxu0 %v711
      %v2620 = vpop.f32.mrf.mxu0
      %v2621 = vadd.f32 0.0, %v2620
      %v2622 = vpop.f32.mrf.mxu0
      %v2623 = vpop.f32.mrf.mxu0
      %v2624 = vadd.f32 0.0, %v2623
      %v2625 = vpop.f32.mrf.mxu0
      %2626 = vmatprep.mubr.bf16.mxu0 0
      %2627 = vmatmul.mubr.bf16.gmra.mxu0 %v1831
      %v2628 = vpop.f32.mrf.mxu0
      %v2629 = vadd.f32 0.0, %v2628
      %v2630 = vpop.f32.mrf.mxu0
      %v2631 = vpop.f32.mrf.mxu0
      %v2632 = vadd.f32 0.0, %v2631
      %v2633 = vpop.f32.mrf.mxu0
      %2634 = vmatprep.mubr.bf16.mxu0 0
      %2635 = vmatmul.mubr.bf16.gmra.mxu0 %v2477
      %v2636 = vpop.f32.mrf.mxu0
      %v2637 = vadd.f32 0.0, %v2636
      %v2638 = vpop.f32.mrf.mxu0
      %v2639 = vpop.f32.mrf.mxu0
      %v2640 = vadd.f32 0.0, %v2639
      %v2641 = vpop.f32.mrf.mxu0
      %2642 = vdwg.mxu0
      %v2643 = vadd.f32 %v2415, %v2517
      %v2644 = vadd.f32 %v2416, %v2520
      %v2645 = vadd.f32 %v2417, %v2525
      %v2646 = vadd.f32 %v2418, %v2528
      %v2647 = vadd.f32 %v2419, %v2533
      %v2648 = vadd.f32 %v2420, %v2536
      %v2649 = vadd.f32 %v2421, %v2541
      %v2650 = vadd.f32 %v2422, %v2544
      %v2651 = vadd.f32 %v2423, %v2549
      %v2652 = vadd.f32 %v2424, %v2552
      %v2653 = vadd.f32 %v2425, %v2557
      %v2654 = vadd.f32 %v2426, %v2560
      %v2655 = vadd.f32 %v2427, %v2565
      %v2656 = vadd.f32 %v2428, %v2568
      %v2657 = vadd.f32 %v2429, %v2573
      %v2658 = vadd.f32 %v2430, %v2576
      %v2659 = vadd.f32 %v2431, %v2581
      %v2660 = vadd.f32 %v2432, %v2584
      %v2661 = vadd.f32 %v2433, %v2589
      %v2662 = vadd.f32 %v2434, %v2592
      %v2663 = vadd.f32 %v2435, %v2597
      %v2664 = vadd.f32 %v2436, %v2600
      %v2665 = vadd.f32 %v2437, %v2605
      %v2666 = vadd.f32 %v2438, %v2608
      %v2667 = vadd.f32 %v2439, %v2613
      %v2668 = vadd.f32 %v2440, %v2616
      %v2669 = vadd.f32 %v2441, %v2621
      %v2670 = vadd.f32 %v2442, %v2624
      %v2671 = vadd.f32 %v2443, %v2629
      %v2672 = vadd.f32 %v2444, %v2632
      %v2673 = vadd.f32 %v2445, %v2637
      %v2674 = vadd.f32 %v2446, %v2640
      %v2676 = vrot.slane %v223, 5
      %v2677 = vrot.slane %v2676, 4
      %v2678 = vrot.slane %v224, 5
      %v2679 = vsel %vm1188, %v2677, %v2678
      %v2680 = vrot.slane %v2678, 4
      %v2681 = vrot.slane %v225, 5
      %v2682 = vsel %vm1188, %v2680, %v2681
      %s2683 = scalar_lea.vmem %s1, 16
      %v2684 = vld [vmem:[%s2683] sm:$0x3]
      %v2685 = vunpack.c.l.b16 %v2679
      %v2686 = vunpack.c.l.b16 %v2682
      %v2687 = vpack.c.b16 %v2686, %v2685
      %v2689 = vsel %vm664, %v2687, 0
      %v2692 = vsel %vm713, %v2684, 0
      %2694 = vmatprep.subr.bf16.mxu0 0
      %2695 = vmatpush1.bf16.msra.mxu0 0
      %2696 = vmatprep.subr.bf16.mxu0 0
      %2697 = vmatpush1.bf16.msra.mxu0 0
      %2698 = vmatprep.subr.bf16.mxu0 0
      %2699 = vmatpush1.bf16.msra.mxu0 0
      %2700 = vmatprep.subr.bf16.mxu0 0
      %2701 = vmatpush1.bf16.msra.mxu0 0
      %2702 = vmatprep.subr.bf16.mxu0 0
      %2703 = vmatpush1.bf16.msra.mxu0 0
      %2704 = vmatprep.subr.bf16.mxu0 0
      %2705 = vmatpush1.bf16.msra.mxu0 0
      %2706 = vmatprep.subr.bf16.mxu0 0
      %2707 = vmatpush1.bf16.msra.mxu0 0
      %2708 = vmatprep.subr.bf16.mxu0 0
      %2709 = vmatpush1.bf16.msra.mxu0 %v2692
      %2710 = vmatprep.subr.bf16.mxu0 0
      %2711 = vmatpush2.bf16.msra.mxu0 0
      %2712 = vmatprep.subr.bf16.mxu0 0
      %2713 = vmatpush2.bf16.msra.mxu0 0
      %2714 = vmatprep.subr.bf16.mxu0 0
      %2715 = vmatpush2.bf16.msra.mxu0 0
      %2716 = vmatprep.subr.bf16.mxu0 0
      %2717 = vmatpush2.bf16.msra.mxu0 0
      %2718 = vmatprep.subr.bf16.mxu0 0
      %2719 = vmatpush2.bf16.msra.mxu0 0
      %2720 = vmatprep.subr.bf16.mxu0 0
      %2721 = vmatpush2.bf16.msra.mxu0 0
      %2722 = vmatprep.subr.bf16.mxu0 0
      %2723 = vmatpush2.bf16.msra.mxu0 0
      %2724 = vmatprep.subr.bf16.mxu0 0
      %2725 = vmatpush2.bf16.msra.mxu0 0
      %2726 = vmatprep.mubr.bf16.mxu0 0
      %2727 = vmatmul.mubr.bf16.gmra.mxu0 %v1358
      %v2728 = vpop.f32.mrf.mxu0
      %v2729 = vadd.f32 0.0, %v2728
      %v2730 = vpop.f32.mrf.mxu0
      %v2731 = vpop.f32.mrf.mxu0
      %v2732 = vadd.f32 0.0, %v2731
      %v2733 = vpop.f32.mrf.mxu0
      %2734 = vmatprep.mubr.bf16.mxu0 0
      %2735 = vmatmul.mubr.bf16.gmra.mxu0 %v1361
      %v2736 = vpop.f32.mrf.mxu0
      %v2737 = vadd.f32 0.0, %v2736
      %v2738 = vpop.f32.mrf.mxu0
      %v2739 = vpop.f32.mrf.mxu0
      %v2740 = vadd.f32 0.0, %v2739
      %v2741 = vpop.f32.mrf.mxu0
      %2742 = vmatprep.mubr.bf16.mxu0 0
      %2743 = vmatmul.mubr.bf16.gmra.mxu0 %v1364
      %v2744 = vpop.f32.mrf.mxu0
      %v2745 = vadd.f32 0.0, %v2744
      %v2746 = vpop.f32.mrf.mxu0
      %v2747 = vpop.f32.mrf.mxu0
      %v2748 = vadd.f32 0.0, %v2747
      %v2749 = vpop.f32.mrf.mxu0
      %2750 = vmatprep.mubr.bf16.mxu0 0
      %2751 = vmatmul.mubr.bf16.gmra.mxu0 %v1367
      %v2752 = vpop.f32.mrf.mxu0
      %v2753 = vadd.f32 0.0, %v2752
      %v2754 = vpop.f32.mrf.mxu0
      %v2755 = vpop.f32.mrf.mxu0
      %v2756 = vadd.f32 0.0, %v2755
      %v2757 = vpop.f32.mrf.mxu0
      %2758 = vmatprep.mubr.bf16.mxu0 0
      %2759 = vmatmul.mubr.bf16.gmra.mxu0 %v1370
      %v2760 = vpop.f32.mrf.mxu0
      %v2761 = vadd.f32 0.0, %v2760
      %v2762 = vpop.f32.mrf.mxu0
      %v2763 = vpop.f32.mrf.mxu0
      %v2764 = vadd.f32 0.0, %v2763
      %v2765 = vpop.f32.mrf.mxu0
      %2766 = vmatprep.mubr.bf16.mxu0 0
      %2767 = vmatmul.mubr.bf16.gmra.mxu0 %v1373
      %v2768 = vpop.f32.mrf.mxu0
      %v2769 = vadd.f32 0.0, %v2768
      %v2770 = vpop.f32.mrf.mxu0
      %v2771 = vpop.f32.mrf.mxu0
      %v2772 = vadd.f32 0.0, %v2771
      %v2773 = vpop.f32.mrf.mxu0
      %2774 = vmatprep.mubr.bf16.mxu0 0
      %2775 = vmatmul.mubr.bf16.gmra.mxu0 %v1376
      %v2776 = vpop.f32.mrf.mxu0
      %v2777 = vadd.f32 0.0, %v2776
      %v2778 = vpop.f32.mrf.mxu0
      %v2779 = vpop.f32.mrf.mxu0
      %v2780 = vadd.f32 0.0, %v2779
      %v2781 = vpop.f32.mrf.mxu0
      %2782 = vmatprep.mubr.bf16.mxu0 0
      %2783 = vmatmul.mubr.bf16.gmra.mxu0 %v1379
      %v2784 = vpop.f32.mrf.mxu0
      %v2785 = vadd.f32 0.0, %v2784
      %v2786 = vpop.f32.mrf.mxu0
      %v2787 = vpop.f32.mrf.mxu0
      %v2788 = vadd.f32 0.0, %v2787
      %v2789 = vpop.f32.mrf.mxu0
      %2790 = vmatprep.mubr.bf16.mxu0 0
      %2791 = vmatmul.mubr.bf16.gmra.mxu0 %v1382
      %v2792 = vpop.f32.mrf.mxu0
      %v2793 = vadd.f32 0.0, %v2792
      %v2794 = vpop.f32.mrf.mxu0
      %v2795 = vpop.f32.mrf.mxu0
      %v2796 = vadd.f32 0.0, %v2795
      %v2797 = vpop.f32.mrf.mxu0
      %2798 = vmatprep.mubr.bf16.mxu0 0
      %2799 = vmatmul.mubr.bf16.gmra.mxu0 %v1385
      %v2800 = vpop.f32.mrf.mxu0
      %v2801 = vadd.f32 0.0, %v2800
      %v2802 = vpop.f32.mrf.mxu0
      %v2803 = vpop.f32.mrf.mxu0
      %v2804 = vadd.f32 0.0, %v2803
      %v2805 = vpop.f32.mrf.mxu0
      %2806 = vmatprep.mubr.bf16.mxu0 0
      %2807 = vmatmul.mubr.bf16.gmra.mxu0 %v1388
      %v2808 = vpop.f32.mrf.mxu0
      %v2809 = vadd.f32 0.0, %v2808
      %v2810 = vpop.f32.mrf.mxu0
      %v2811 = vpop.f32.mrf.mxu0
      %v2812 = vadd.f32 0.0, %v2811
      %v2813 = vpop.f32.mrf.mxu0
      %2814 = vmatprep.mubr.bf16.mxu0 0
      %2815 = vmatmul.mubr.bf16.gmra.mxu0 %v1391
      %v2816 = vpop.f32.mrf.mxu0
      %v2817 = vadd.f32 0.0, %v2816
      %v2818 = vpop.f32.mrf.mxu0
      %v2819 = vpop.f32.mrf.mxu0
      %v2820 = vadd.f32 0.0, %v2819
      %v2821 = vpop.f32.mrf.mxu0
      %2822 = vmatprep.mubr.bf16.mxu0 0
      %2823 = vmatmul.mubr.bf16.gmra.mxu0 %v1394
      %v2824 = vpop.f32.mrf.mxu0
      %v2825 = vadd.f32 0.0, %v2824
      %v2826 = vpop.f32.mrf.mxu0
      %v2827 = vpop.f32.mrf.mxu0
      %v2828 = vadd.f32 0.0, %v2827
      %v2829 = vpop.f32.mrf.mxu0
      %2830 = vmatprep.mubr.bf16.mxu0 0
      %2831 = vmatmul.mubr.bf16.gmra.mxu0 %v1397
      %v2832 = vpop.f32.mrf.mxu0
      %v2833 = vadd.f32 0.0, %v2832
      %v2834 = vpop.f32.mrf.mxu0
      %v2835 = vpop.f32.mrf.mxu0
      %v2836 = vadd.f32 0.0, %v2835
      %v2837 = vpop.f32.mrf.mxu0
      %2838 = vmatprep.mubr.bf16.mxu0 0
      %2839 = vmatmul.mubr.bf16.gmra.mxu0 %v2043
      %v2840 = vpop.f32.mrf.mxu0
      %v2841 = vadd.f32 0.0, %v2840
      %v2842 = vpop.f32.mrf.mxu0
      %v2843 = vpop.f32.mrf.mxu0
      %v2844 = vadd.f32 0.0, %v2843
      %v2845 = vpop.f32.mrf.mxu0
      %2846 = vmatprep.mubr.bf16.mxu0 0
      %2847 = vmatmul.mubr.bf16.gmra.mxu0 %v2689
      %v2848 = vpop.f32.mrf.mxu0
      %v2849 = vadd.f32 0.0, %v2848
      %v2850 = vpop.f32.mrf.mxu0
      %v2851 = vpop.f32.mrf.mxu0
      %v2852 = vadd.f32 0.0, %v2851
      %v2853 = vpop.f32.mrf.mxu0
      %2854 = vdwg.mxu0
      %v2855 = vadd.f32 %v2643, %v2729
      %v2856 = vadd.f32 %v2644, %v2732
      %v2857 = vadd.f32 %v2645, %v2737
      %v2858 = vadd.f32 %v2646, %v2740
      %v2859 = vadd.f32 %v2647, %v2745
      %v2860 = vadd.f32 %v2648, %v2748
      %v2861 = vadd.f32 %v2649, %v2753
      %v2862 = vadd.f32 %v2650, %v2756
      %v2863 = vadd.f32 %v2651, %v2761
      %v2864 = vadd.f32 %v2652, %v2764
      %v2865 = vadd.f32 %v2653, %v2769
      %v2866 = vadd.f32 %v2654, %v2772
      %v2867 = vadd.f32 %v2655, %v2777
      %v2868 = vadd.f32 %v2656, %v2780
      %v2869 = vadd.f32 %v2657, %v2785
      %v2870 = vadd.f32 %v2658, %v2788
      %v2871 = vadd.f32 %v2659, %v2793
      %v2872 = vadd.f32 %v2660, %v2796
      %v2873 = vadd.f32 %v2661, %v2801
      %v2874 = vadd.f32 %v2662, %v2804
      %v2875 = vadd.f32 %v2663, %v2809
      %v2876 = vadd.f32 %v2664, %v2812
      %v2877 = vadd.f32 %v2665, %v2817
      %v2878 = vadd.f32 %v2666, %v2820
      %v2879 = vadd.f32 %v2667, %v2825
      %v2880 = vadd.f32 %v2668, %v2828
      %v2881 = vadd.f32 %v2669, %v2833
      %v2882 = vadd.f32 %v2670, %v2836
      %v2883 = vadd.f32 %v2671, %v2841
      %v2884 = vadd.f32 %v2672, %v2844
      %v2885 = vadd.f32 %v2673, %v2849
      %v2886 = vadd.f32 %v2674, %v2852
      %v2887 = vld [vmem:[%s2] sm:$0x1]
      %v2889 = vlaneseq
      %v2890 = vshrl.u32 %v2889, 7
      %v2891 = vsub.s32 0, %v2890
      %v2892 = vrot.slane %v2887, %v2891
      %v2894 = vadd.f32 %v2855, %v2892
      %v2895 = vadd.f32 %v2856, %v2892
      %v2896 = vadd.f32 %v2857, %v2892
      %v2897 = vadd.f32 %v2858, %v2892
      %v2898 = vadd.f32 %v2859, %v2892
      %v2899 = vadd.f32 %v2860, %v2892
      %v2900 = vadd.f32 %v2861, %v2892
      %v2901 = vadd.f32 %v2862, %v2892
      %v2902 = vadd.f32 %v2863, %v2892
      %v2903 = vadd.f32 %v2864, %v2892
      %v2904 = vadd.f32 %v2865, %v2892
      %v2905 = vadd.f32 %v2866, %v2892
      %v2906 = vadd.f32 %v2867, %v2892
      %v2907 = vadd.f32 %v2868, %v2892
      %v2908 = vadd.f32 %v2869, %v2892
      %v2909 = vadd.f32 %v2870, %v2892
      %v2910 = vadd.f32 %v2871, %v2892
      %v2911 = vadd.f32 %v2872, %v2892
      %v2912 = vadd.f32 %v2873, %v2892
      %v2913 = vadd.f32 %v2874, %v2892
      %v2914 = vadd.f32 %v2875, %v2892
      %v2915 = vadd.f32 %v2876, %v2892
      %v2916 = vadd.f32 %v2877, %v2892
      %v2917 = vadd.f32 %v2878, %v2892
      %v2918 = vadd.f32 %v2879, %v2892
      %v2919 = vadd.f32 %v2880, %v2892
      %v2920 = vadd.f32 %v2881, %v2892
      %v2921 = vadd.f32 %v2882, %v2892
      %v2922 = vadd.f32 %v2883, %v2892
      %v2923 = vadd.f32 %v2884, %v2892
      %v2924 = vadd.f32 %v2885, %v2892
      %v2925 = vadd.f32 %v2886, %v2892
      %v2926 = vxor.u32 %v2894, 2147483648
      %v2927 = vxor.u32 %v2895, 2147483648
      %v2928 = vxor.u32 %v2896, 2147483648
      %v2929 = vxor.u32 %v2897, 2147483648
      %v2930 = vxor.u32 %v2898, 2147483648
      %v2931 = vxor.u32 %v2899, 2147483648
      %v2932 = vxor.u32 %v2900, 2147483648
      %v2933 = vxor.u32 %v2901, 2147483648
      %v2934 = vxor.u32 %v2902, 2147483648
      %v2935 = vxor.u32 %v2903, 2147483648
      %v2936 = vxor.u32 %v2904, 2147483648
      %v2937 = vxor.u32 %v2905, 2147483648
      %v2938 = vxor.u32 %v2906, 2147483648
      %v2939 = vxor.u32 %v2907, 2147483648
      %v2940 = vxor.u32 %v2908, 2147483648
      %v2941 = vxor.u32 %v2909, 2147483648
      %v2942 = vxor.u32 %v2910, 2147483648
      %v2943 = vxor.u32 %v2911, 2147483648
      %v2944 = vxor.u32 %v2912, 2147483648
      %v2945 = vxor.u32 %v2913, 2147483648
      %v2946 = vxor.u32 %v2914, 2147483648
      %v2947 = vxor.u32 %v2915, 2147483648
      %v2948 = vxor.u32 %v2916, 2147483648
      %v2949 = vxor.u32 %v2917, 2147483648
      %v2950 = vxor.u32 %v2918, 2147483648
      %v2951 = vxor.u32 %v2919, 2147483648
      %v2952 = vxor.u32 %v2920, 2147483648
      %v2953 = vxor.u32 %v2921, 2147483648
      %v2954 = vxor.u32 %v2922, 2147483648
      %v2955 = vxor.u32 %v2923, 2147483648
      %v2956 = vxor.u32 %v2924, 2147483648
      %v2957 = vxor.u32 %v2925, 2147483648
      %v2958 = vmul.f32 %v2926, 1.442695
      %v2959 = vpow.pop %v2958
      %v2960 = vmul.f32 %v2927, 1.442695
      %v2961 = vpow.pop %v2960
      %v2962 = vmul.f32 %v2928, 1.442695
      %v2963 = vpow.pop %v2962
      %v2964 = vmul.f32 %v2929, 1.442695
      %v2965 = vpow.pop %v2964
      %v2966 = vmul.f32 %v2930, 1.442695
      %v2967 = vpow.pop %v2966
      %v2968 = vmul.f32 %v2931, 1.442695
      %v2969 = vpow.pop %v2968
      %v2970 = vmul.f32 %v2932, 1.442695
      %v2971 = vpow.pop %v2970
      %v2972 = vmul.f32 %v2933, 1.442695
      %v2973 = vpow.pop %v2972
      %v2974 = vmul.f32 %v2934, 1.442695
      %v2975 = vpow.pop %v2974
      %v2976 = vmul.f32 %v2935, 1.442695
      %v2977 = vpow.pop %v2976
      %v2978 = vmul.f32 %v2936, 1.442695
      %v2979 = vpow.pop %v2978
      %v2980 = vmul.f32 %v2937, 1.442695
      %v2981 = vpow.pop %v2980
      %v2982 = vmul.f32 %v2938, 1.442695
      %v2983 = vpow.pop %v2982
      %v2984 = vmul.f32 %v2939, 1.442695
      %v2985 = vpow.pop %v2984
      %v2986 = vmul.f32 %v2940, 1.442695
      %v2987 = vpow.pop %v2986
      %v2988 = vmul.f32 %v2941, 1.442695
      %v2989 = vpow.pop %v2988
      %v2990 = vmul.f32 %v2942, 1.442695
      %v2991 = vpow.pop %v2990
      %v2992 = vmul.f32 %v2943, 1.442695
      %v2993 = vpow.pop %v2992
      %v2994 = vmul.f32 %v2944, 1.442695
      %v2995 = vpow.pop %v2994
      %v2996 = vmul.f32 %v2945, 1.442695
      %v2997 = vpow.pop %v2996
      %v2998 = vmul.f32 %v2946, 1.442695
      %v2999 = vpow.pop %v2998
      %v3000 = vmul.f32 %v2947, 1.442695
      %v3001 = vpow.pop %v3000
      %v3002 = vmul.f32 %v2948, 1.442695
      %v3003 = vpow.pop %v3002
      %v3004 = vmul.f32 %v2949, 1.442695
      %v3005 = vpow.pop %v3004
      %v3006 = vmul.f32 %v2950, 1.442695
      %v3007 = vpow.pop %v3006
      %v3008 = vmul.f32 %v2951, 1.442695
      %v3009 = vpow.pop %v3008
      %v3010 = vmul.f32 %v2952, 1.442695
      %v3011 = vpow.pop %v3010
      %v3012 = vmul.f32 %v2953, 1.442695
      %v3013 = vpow.pop %v3012
      %v3014 = vmul.f32 %v2954, 1.442695
      %v3015 = vpow.pop %v3014
      %v3016 = vmul.f32 %v2955, 1.442695
      %v3017 = vpow.pop %v3016
      %v3018 = vmul.f32 %v2956, 1.442695
      %v3019 = vpow.pop %v3018
      %v3020 = vmul.f32 %v2957, 1.442695
      %v3021 = vpow.pop %v3020
      %v3022 = vadd.f32 %v2959, 1.0
      %v3023 = vadd.f32 %v2961, 1.0
      %v3024 = vadd.f32 %v2963, 1.0
      %v3025 = vadd.f32 %v2965, 1.0
      %v3026 = vadd.f32 %v2967, 1.0
      %v3027 = vadd.f32 %v2969, 1.0
      %v3028 = vadd.f32 %v2971, 1.0
      %v3029 = vadd.f32 %v2973, 1.0
      %v3030 = vadd.f32 %v2975, 1.0
      %v3031 = vadd.f32 %v2977, 1.0
      %v3032 = vadd.f32 %v2979, 1.0
      %v3033 = vadd.f32 %v2981, 1.0
      %v3034 = vadd.f32 %v2983, 1.0
      %v3035 = vadd.f32 %v2985, 1.0
      %v3036 = vadd.f32 %v2987, 1.0
      %v3037 = vadd.f32 %v2989, 1.0
      %v3038 = vadd.f32 %v2991, 1.0
      %v3039 = vadd.f32 %v2993, 1.0
      %v3040 = vadd.f32 %v2995, 1.0
      %v3041 = vadd.f32 %v2997, 1.0
      %v3042 = vadd.f32 %v2999, 1.0
      %v3043 = vadd.f32 %v3001, 1.0
      %v3044 = vadd.f32 %v3003, 1.0
      %v3045 = vadd.f32 %v3005, 1.0
      %v3046 = vadd.f32 %v3007, 1.0
      %v3047 = vadd.f32 %v3009, 1.0
      %v3048 = vadd.f32 %v3011, 1.0
      %v3049 = vadd.f32 %v3013, 1.0
      %v3050 = vadd.f32 %v3015, 1.0
      %v3051 = vadd.f32 %v3017, 1.0
      %v3052 = vadd.f32 %v3019, 1.0
      %v3053 = vadd.f32 %v3021, 1.0
      %v3054 = vrcp.pop %v3022
      %v3055 = vmul.f32 1.0, %v3054
      %v3056 = vrcp.pop %v3023
      %v3057 = vmul.f32 1.0, %v3056
      %v3058 = vrcp.pop %v3024
      %v3059 = vmul.f32 1.0, %v3058
      %v3060 = vrcp.pop %v3025
      %v3061 = vmul.f32 1.0, %v3060
      %v3062 = vrcp.pop %v3026
      %v3063 = vmul.f32 1.0, %v3062
      %v3064 = vrcp.pop %v3027
      %v3065 = vmul.f32 1.0, %v3064
      %v3066 = vrcp.pop %v3028
      %v3067 = vmul.f32 1.0, %v3066
      %v3068 = vrcp.pop %v3029
      %v3069 = vmul.f32 1.0, %v3068
      %v3070 = vrcp.pop %v3030
      %v3071 = vmul.f32 1.0, %v3070
      %v3072 = vrcp.pop %v3031
      %v3073 = vmul.f32 1.0, %v3072
      %v3074 = vrcp.pop %v3032
      %v3075 = vmul.f32 1.0, %v3074
      %v3076 = vrcp.pop %v3033
      %v3077 = vmul.f32 1.0, %v3076
      %v3078 = vrcp.pop %v3034
      %v3079 = vmul.f32 1.0, %v3078
      %v3080 = vrcp.pop %v3035
      %v3081 = vmul.f32 1.0, %v3080
      %v3082 = vrcp.pop %v3036
      %v3083 = vmul.f32 1.0, %v3082
      %v3084 = vrcp.pop %v3037
      %v3085 = vmul.f32 1.0, %v3084
      %v3086 = vrcp.pop %v3038
      %v3087 = vmul.f32 1.0, %v3086
      %v3088 = vrcp.pop %v3039
      %v3089 = vmul.f32 1.0, %v3088
      %v3090 = vrcp.pop %v3040
      %v3091 = vmul.f32 1.0, %v3090
      %v3092 = vrcp.pop %v3041
      %v3093 = vmul.f32 1.0, %v3092
      %v3094 = vrcp.pop %v3042
      %v3095 = vmul.f32 1.0, %v3094
      %v3096 = vrcp.pop %v3043
      %v3097 = vmul.f32 1.0, %v3096
      %v3098 = vrcp.pop %v3044
      %v3099 = vmul.f32 1.0, %v3098
      %v3100 = vrcp.pop %v3045
      %v3101 = vmul.f32 1.0, %v3100
      %v3102 = vrcp.pop %v3046
      %v3103 = vmul.f32 1.0, %v3102
      %v3104 = vrcp.pop %v3047
      %v3105 = vmul.f32 1.0, %v3104
      %v3106 = vrcp.pop %v3048
      %v3107 = vmul.f32 1.0, %v3106
      %v3108 = vrcp.pop %v3049
      %v3109 = vmul.f32 1.0, %v3108
      %v3110 = vrcp.pop %v3050
      %v3111 = vmul.f32 1.0, %v3110
      %v3112 = vrcp.pop %v3051
      %v3113 = vmul.f32 1.0, %v3112
      %v3114 = vrcp.pop %v3052
      %v3115 = vmul.f32 1.0, %v3114
      %v3116 = vrcp.pop %v3053
      %v3117 = vmul.f32 1.0, %v3116
      %v3118 = vmul.f32 %v2894, %v3055
      %v3119 = vmul.f32 %v2895, %v3057
      %v3120 = vmul.f32 %v2896, %v3059
      %v3121 = vmul.f32 %v2897, %v3061
      %v3122 = vmul.f32 %v2898, %v3063
      %v3123 = vmul.f32 %v2899, %v3065
      %v3124 = vmul.f32 %v2900, %v3067
      %v3125 = vmul.f32 %v2901, %v3069
      %v3126 = vmul.f32 %v2902, %v3071
      %v3127 = vmul.f32 %v2903, %v3073
      %v3128 = vmul.f32 %v2904, %v3075
      %v3129 = vmul.f32 %v2905, %v3077
      %v3130 = vmul.f32 %v2906, %v3079
      %v3131 = vmul.f32 %v2907, %v3081
      %v3132 = vmul.f32 %v2908, %v3083
      %v3133 = vmul.f32 %v2909, %v3085
      %v3134 = vmul.f32 %v2910, %v3087
      %v3135 = vmul.f32 %v2911, %v3089
      %v3136 = vmul.f32 %v2912, %v3091
      %v3137 = vmul.f32 %v2913, %v3093
      %v3138 = vmul.f32 %v2914, %v3095
      %v3139 = vmul.f32 %v2915, %v3097
      %v3140 = vmul.f32 %v2916, %v3099
      %v3141 = vmul.f32 %v2917, %v3101
      %v3142 = vmul.f32 %v2918, %v3103
      %v3143 = vmul.f32 %v2919, %v3105
      %v3144 = vmul.f32 %v2920, %v3107
      %v3145 = vmul.f32 %v2921, %v3109
      %v3146 = vmul.f32 %v2922, %v3111
      %v3147 = vmul.f32 %v2923, %v3113
      %v3148 = vmul.f32 %v2924, %v3115
      %v3149 = vmul.f32 %v2925, %v3117
      %3150 = vst [vmem:[%s170] sm:$0xff] %v3118
      %3151 = vst [vmem:[%s170 + $0x8] sm:$0xff] %v3119
      %3152 = vst [vmem:[%s170 + $0x10] sm:$0xff] %v3120
      %3153 = vst [vmem:[%s170 + $0x18] sm:$0xff] %v3121
      %3154 = vst [vmem:[%s170 + $0x20] sm:$0xff] %v3122
      %3155 = vst [vmem:[%s170 + $0x28] sm:$0xff] %v3123
      %3156 = vst [vmem:[%s170 + $0x30] sm:$0xff] %v3124
      %3157 = vst [vmem:[%s170 + $0x38] sm:$0xff] %v3125
      %3158 = vst [vmem:[%s170 + $0x40] sm:$0xff] %v3126
      %3159 = vst [vmem:[%s170 + $0x48] sm:$0xff] %v3127
      %3160 = vst [vmem:[%s170 + $0x50] sm:$0xff] %v3128
      %3161 = vst [vmem:[%s170 + $0x58] sm:$0xff] %v3129
      %3162 = vst [vmem:[%s170 + $0x60] sm:$0xff] %v3130
      %3163 = vst [vmem:[%s170 + $0x68] sm:$0xff] %v3131
      %3164 = vst [vmem:[%s170 + $0x70] sm:$0xff] %v3132
      %3165 = vst [vmem:[%s170 + $0x78] sm:$0xff] %v3133
      %3166 = vst [vmem:[%s170 + $0x80] sm:$0xff] %v3134
      %3167 = vst [vmem:[%s170 + $0x88] sm:$0xff] %v3135
      %3168 = vst [vmem:[%s170 + $0x90] sm:$0xff] %v3136
      %3169 = vst [vmem:[%s170 + $0x98] sm:$0xff] %v3137
      %3170 = vst [vmem:[%s170 + $0xa0] sm:$0xff] %v3138
      %3171 = vst [vmem:[%s170 + $0xa8] sm:$0xff] %v3139
      %3172 = vst [vmem:[%s170 + $0xb0] sm:$0xff] %v3140
      %3173 = vst [vmem:[%s170 + $0xb8] sm:$0xff] %v3141
      %3174 = vst [vmem:[%s170 + $0xc0] sm:$0xff] %v3142
      %3175 = vst [vmem:[%s170 + $0xc8] sm:$0xff] %v3143
      %3176 = vst [vmem:[%s170 + $0xd0] sm:$0xff] %v3144
      %3177 = vst [vmem:[%s170 + $0xd8] sm:$0xff] %v3145
      %3178 = vst [vmem:[%s170 + $0xe0] sm:$0xff] %v3146
      %3179 = vst [vmem:[%s170 + $0xe8] sm:$0xff] %v3147
      %3180 = vst [vmem:[%s170 + $0xf0] sm:$0xff] %v3148
      %3181 = vst [vmem:[%s170 + $0xf8] sm:$0xff] %v3149
      %p3182 = scmp.lt.s32.totalorder %s14, 1
      %s3183 = scalar_select %p3182, %s14, 1
      %s3184 = smul.addr %s3183, 32
      %s3185 = smul.addr %s3184, 8
      %s3186 = scalar_lea.vmem %s3, %s3185
      // Predicated region
      $region33: #{conv_bn_activation.1} parent=31 // pred_check
        %p3187 = pneg %p100
      $region34: #{conv_bn_activation.1} parent=31 // pred_check_branch
        %3189 = sbr.rel (%p3187) target = $region36
      $region35: #{conv_bn_activation.1} parent=31 // pred_region
        _
      $region36: #{conv_bn_activation.1} parent=31 // pred_fallthru
        _
    $region32: #{conv_bn_activation.1} parent=5 // pred_fallthru
      _
    %p3190 = scmp.le.s32.totalorder 2, %s9
    // Predicated region
    $region37: #{conv_bn_activation.1} parent=5 // pred_check
      %p3191 = pneg %p3190
    $region38: #{conv_bn_activation.1} parent=5 // pred_check_branch
      %3193 = sbr.rel (%p3191) target = $region40
    $region39: #{conv_bn_activation.1} parent=5 // pred_region
      %s3194 = ssub.s32 %s9, 2
      // Predicated region
      $region41: #{conv_bn_activation.1} parent=39 // pred_check
        %p3195 = pneg %p106
      $region42: #{conv_bn_activation.1} parent=39 // pred_check_branch
        %3197 = sbr.rel (%p3195) target = $region44
      $region43: #{conv_bn_activation.1} parent=39 // pred_region
        %p3198 = scmp.lt.s32.totalorder %s15, 1
        %s3199 = scalar_select %p3198, %s15, 1
        %s3200 = smul.addr %s3199, 32
        %s3201 = smul.addr %s3200, 8
        %s3202 = scalar_lea.vmem %s3, %s3201
      $region44: #{conv_bn_activation.1} parent=39 // pred_fallthru
        _
    $region40: #{conv_bn_activation.1} parent=5 // pred_fallthru
      _
  $region6: #{conv_bn_activation.1} parent=0 // loop_footer
    %s13 = sadd.s32 1, %s9
  $region7: #{conv_bn_activation.1} parent=0 // loop_footer_branch
    %8 = sbr.rel target = $region3
  $region8: #{conv_bn_activation.1} parent=0 // loop_exit
    _

</llo_original>
